<compile_context>
chip_gen: v7x
topology: tpu7x:2x2x1
jax: 0.10.0
libtpu: 0.0.40
codegen_flags: <defaults>
</compile_context>

<pallas_src>
import jax
import jax.numpy as jnp
from jax import lax
from jax.experimental import pallas as pl
from jax.experimental.pallas import tpu as pltpu


def _make_blur_kernel(l):
    def _blur_kernel(ker_ref, pad_ref, out_ref):
        # ker_ref: (l, l, Gc) f32   -- per-lane (per-channel) coefficients
        # pad_ref: (H_p, W_p, Gc)   -- full padded image for this channel group
        # out_ref: (TH, W, Gc)      -- TH output rows of this group
        TH, W, Gc = out_ref.shape
        h0 = pl.multiple_of(pl.program_id(1) * TH, TH)      # first output row

        def row_taps(i, acc):
            # One kernel row: l statically unrolled column taps; each tap is a
            # load-unit-shifted window (address/sublane offsets only).
            krow = ker_ref[i]                                # (l, Gc) f32
            for j in range(l):
                coeff = krow[j]                              # (Gc,) f32, per lane
                tap = pad_ref[pl.ds(h0 + i, TH), pl.ds(j, W), :]
                term = tap.astype(jnp.float32) * coeff
                acc = term if acc is None else acc + term
            return acc

        # Init accumulator with the first row of taps, then fori_loop the rest
        # (bounds live ranges / instruction stream for the 225-tap stencil).
        acc = row_taps(0, None)
        acc = lax.fori_loop(1, l, row_taps, acc, unroll=False)
        out_ref[...] = acc.astype(out_ref.dtype)

    return _blur_kernel


def _vmem_capacity_bytes():
    try:
        info = pltpu.get_tpu_info()
        cap = getattr(info, "vmem_capacity_bytes", None)
        if cap:
            return int(cap)
    except Exception:
        pass
    return 64 * 1024 * 1024   # conservative default (v7x: 64 MiB per TensorCore)


def batch_blur(x, kernel, l=15):
    """x: (B, C, H, W); kernel: (l, l) shared or (B, l, l) per-batch."""
    B, C, H, W = x.shape
    if l % 2 == 1:
        ph = (l // 2, l // 2)
        pw = (l // 2, l // 2)
    else:
        # ReflectionPad2d((left, right, top, bottom)) = (l//2, l//2-1, l//2, l//2-1)
        ph = (l // 2, l // 2 - 1)
        pw = (l // 2, l // 2 - 1)
    # TODO(synk): fold the reflect pad into the kernel via halo DMA to avoid
    # this extra HBM round trip.
    pad = jnp.pad(x, ((0, 0), (0, 0), ph, pw), mode="reflect")   # (B,C,H_p,W_p)
    H_p, W_p = pad.shape[-2], pad.shape[-1]

    # Per-channel coefficients (f32), b-major / c-minor (matches pad.view(C*B,..)).
    kernel = kernel.astype(jnp.float32)
    NC = B * C
    if kernel.ndim == 2:
        coeff = jnp.broadcast_to(kernel, (NC, l, l))
    else:
        assert kernel.shape[0] == B, "per-batch kernel must have leading dim B"
        coeff = jnp.repeat(kernel, C, axis=0)                     # (B*C, l, l)

    # --- Generation-dependent VMEM budgeting -------------------------------
    cap = _vmem_capacity_bytes()
    if cap >= 128 * 1024 * 1024:          # v5e / v6e (128 MiB VMEM)
        block_budget = 40 * 1024 * 1024
        vmem_limit = 100 * 1024 * 1024
    else:                                 # v7x (64 MiB per TensorCore)
        block_budget = 16 * 1024 * 1024
        vmem_limit = 40 * 1024 * 1024

    itemsize = jnp.dtype(x.dtype).itemsize

    def _block_bytes(gc):
        # double-buffered input + output + coefficient blocks for one group
        return 2 * ((H_p * W_p + H * W) * gc * itemsize + l * l * gc * 4)

    # Channels per group (= lanes per block): largest divisor of B*C fitting
    # the budget.  Full-extent last dim, so no 128-multiple requirement.
    divisors = [d for d in range(1, NC + 1) if NC % d == 0]
    fitting_gc = [d for d in divisors if _block_bytes(d) <= block_budget] or [1]
    Gc = max(fitting_gc)
    G = NC // Gc
    # TODO(synk): spatial halo tiling for images so large that even a single
    # channel exceeds the VMEM budget.

    # Output-row tile: bound the f32 fori-loop accumulator (vreg pressure) and
    # guarantee >= 2 grid blocks so both v7x TensorCores get work.
    acc_elems_budget = 16 * 1024          # ~64 KiB f32 accumulator carry
    min_grid_blocks = 2
    th_divs = [d for d in range(1, H + 1) if H % d == 0]
    fitting_th = [d for d in th_divs if d * W * Gc <= acc_elems_budget] or [1]
    preferred = [d for d in fitting_th if G * (H // d) >= min_grid_blocks]
    TH = max(preferred) if preferred else max(fitting_th)
    num_hb = H // TH

    # --- Channels-last relayout: channel group -> lane dimension ------------
    pad_g = pad.reshape(G, Gc, H_p, W_p).transpose(0, 2, 3, 1)     # (G,H_p,W_p,Gc)
    coeff_g = coeff.reshape(G, Gc, l, l).transpose(0, 2, 3, 1)     # (G,l,l,Gc)

    cost = pl.CostEstimate(
        flops=2 * l * l * NC * H * W,
        transcendentals=0,
        bytes_accessed=(pad_g.size * itemsize + coeff_g.size * 4
                        + NC * H * W * itemsize),
    )

    out_g = pl.pallas_call(
        _make_blur_kernel(l),
        out_shape=jax.ShapeDtypeStruct((G, H, W, Gc), x.dtype),
        grid_spec=pltpu.PrefetchScalarGridSpec(
            num_scalar_prefetch=0,
            # h is the innermost axis: padded-input block index is constant
            # across it, so the input stays resident per channel group.
            grid=(G, num_hb),
            in_specs=[
                pl.BlockSpec((None, l, l, Gc), lambda g, h: (g, 0, 0, 0)),
                pl.BlockSpec((None, H_p, W_p, Gc), lambda g, h: (g, 0, 0, 0)),
            ],
            out_specs=pl.BlockSpec((None, TH, W, Gc), lambda g, h: (g, h, 0, 0)),
        ),
        compiler_params=pltpu.CompilerParams(
            dimension_semantics=("parallel", "parallel"),
            vmem_limit_bytes=vmem_limit),
        cost_estimate=cost,
    )(coeff_g, pad_g)

    return out_g.transpose(0, 3, 1, 2).reshape(B, C, H, W)


def _reference(x, kernel, l=15):
    """Pure-JAX reference mirroring the PyTorch forward (depthwise conv)."""
    B, C, H, W = x.shape
    if l % 2 == 1:
        ph = (l // 2, l // 2); pw = (l // 2, l // 2)
    else:
        ph = (l // 2, l // 2 - 1); pw = (l // 2, l // 2 - 1)
    pad = jnp.pad(x, ((0, 0), (0, 0), ph, pw), mode="reflect")
    H_p, W_p = pad.shape[-2], pad.shape[-1]
    pad_flat = pad.reshape(B * C, H_p, W_p)
    if kernel.ndim == 2:
        ker_flat = jnp.broadcast_to(kernel, (B * C, l, l))
    else:
        ker_flat = jnp.repeat(kernel, C, axis=0)
    lhs = pad_flat[None].astype(jnp.float32)             # (1, B*C, H_p, W_p)
    rhs = ker_flat[:, None].astype(jnp.float32)          # (B*C, 1, l, l)
    out = lax.conv_general_dilated(
        lhs, rhs, window_strides=(1, 1), padding="VALID",
        feature_group_count=B * C,
        dimension_numbers=("NCHW", "OIHW", "NCHW"))
    return out[0].reshape(B, C, H, W).astype(x.dtype)


def _gaussian_kernel(l, sigma):
    ax = jnp.arange(l, dtype=jnp.float32) - (l - 1) / 2.0
    g = jnp.exp(-(ax ** 2) / (2.0 * sigma ** 2))
    k = jnp.outer(g, g)
    return k / jnp.sum(k)


if __name__ == "__main__":
    B, C, H, W, L = 2, 4, 16, 16, 15
    key = jax.random.PRNGKey(0)
    kx, _ = jax.random.split(key)
    x = jax.random.normal(kx, (B, C, H, W), dtype=jnp.float32)

    # Case 1: single shared (l, l) blur kernel.
    k2d = _gaussian_kernel(L, sigma=2.0)
    y2d = jax.block_until_ready(batch_blur(x, k2d, l=L))

    # Case 2: per-batch (B, l, l) blur kernels.
    k3d = jnp.stack([_gaussian_kernel(L, sigma=1.5),
                     _gaussian_kernel(L, sigma=3.0)], axis=0)
    y3d = jax.block_until_ready(batch_blur(x, k3d, l=L))

    ref2d = _reference(x, k2d, l=L)
    ref3d = _reference(x, k3d, l=L)
    assert y2d.shape == (B, C, H, W) and y3d.shape == (B, C, H, W)
    assert jnp.allclose(y2d, ref2d, atol=1e-4, rtol=1e-4)
    assert jnp.allclose(y3d, ref3d, atol=1e-4, rtol=1e-4)

    print("KERNEL_OK")
</pallas_src>

<mosaic_0001>
module attributes {stable_mosaic.version = 11 : i64} {
  func.func @_blur_kernel(%arg0: i32, %arg1: i32, %arg2: memref<1x15x15x8xf32, #tpu.memory_space<vmem>>, %arg3: memref<1x30x30x8xf32, #tpu.memory_space<vmem>>, %arg4: memref<1x8x16x8xf32, #tpu.memory_space<vmem>>) attributes {dimension_semantics = [#tpu.dimension_semantics<parallel>, #tpu.dimension_semantics<parallel>], iteration_bounds = array<i64: 1, 2>, scalar_prefetch = 0 : i64, scratch_operands = 0 : i64, tpu.core_type = #tpu.core_type<tc>, window_params = [{transform_indices = @transform_0, window_bounds = array<i64: 1, 15, 15, 8>}, {transform_indices = @transform_1, window_bounds = array<i64: 1, 30, 30, 8>}, {transform_indices = @transform_2, window_bounds = array<i64: 1, 8, 16, 8>}]} {
    %c8_i32 = arith.constant 8 : i32
    %0 = arith.muli %arg1, %c8_i32 : i32
    %1 = tpu.assume_multiple %0, 8 : i32
    %c0 = arith.constant 0 : index
    %c0_0 = arith.constant 0 : index
    %c0_1 = arith.constant 0 : index
    %c0_2 = arith.constant 0 : index
    %2 = vector.load %arg2[%c0, %c0_0, %c0_1, %c0_2] : memref<1x15x15x8xf32, #tpu.memory_space<vmem>>, vector<1x1x15x8xf32>
    %3 = vector.shape_cast %2 : vector<1x1x15x8xf32> to vector<15x8xf32>
    %4 = vector.extract_strided_slice %3 {offsets = [0, 0], sizes = [1, 8], strides = [1, 1]} : vector<15x8xf32> to vector<1x8xf32>
    %5 = vector.shape_cast %4 : vector<1x8xf32> to vector<8xf32>
    %c0_i32 = arith.constant 0 : i32
    %6 = arith.addi %1, %c0_i32 : i32
    %c0_3 = arith.constant 0 : index
    %7 = arith.index_cast %6 : i32 to index
    %c0_4 = arith.constant 0 : index
    %c0_5 = arith.constant 0 : index
    %8 = vector.load %arg3[%c0_3, %7, %c0_4, %c0_5] : memref<1x30x30x8xf32, #tpu.memory_space<vmem>>, vector<1x8x16x8xf32>
    %9 = vector.shape_cast %8 : vector<1x8x16x8xf32> to vector<8x16x8xf32>
    %10 = vector.shape_cast %5 : vector<8xf32> to vector<1x1x8xf32>
    %11 = vector.broadcast %10 : vector<1x1x8xf32> to vector<8x16x8xf32>
    %12 = arith.mulf %9, %11 : vector<8x16x8xf32>
    %13 = vector.extract_strided_slice %3 {offsets = [1, 0], sizes = [1, 8], strides = [1, 1]} : vector<15x8xf32> to vector<1x8xf32>
    %14 = vector.shape_cast %13 : vector<1x8xf32> to vector<8xf32>
    %c0_i32_6 = arith.constant 0 : i32
    %15 = arith.addi %1, %c0_i32_6 : i32
    %c0_7 = arith.constant 0 : index
    %16 = arith.index_cast %15 : i32 to index
    %c1 = arith.constant 1 : index
    %c0_8 = arith.constant 0 : index
    %17 = vector.load %arg3[%c0_7, %16, %c1, %c0_8] : memref<1x30x30x8xf32, #tpu.memory_space<vmem>>, vector<1x8x16x8xf32>
    %18 = vector.shape_cast %17 : vector<1x8x16x8xf32> to vector<8x16x8xf32>
    %19 = vector.shape_cast %14 : vector<8xf32> to vector<1x1x8xf32>
    %20 = vector.broadcast %19 : vector<1x1x8xf32> to vector<8x16x8xf32>
    %21 = arith.mulf %18, %20 : vector<8x16x8xf32>
    %22 = arith.addf %12, %21 : vector<8x16x8xf32>
    %23 = vector.extract_strided_slice %3 {offsets = [2, 0], sizes = [1, 8], strides = [1, 1]} : vector<15x8xf32> to vector<1x8xf32>
    %24 = vector.shape_cast %23 : vector<1x8xf32> to vector<8xf32>
    %c0_i32_9 = arith.constant 0 : i32
    %25 = arith.addi %1, %c0_i32_9 : i32
    %c0_10 = arith.constant 0 : index
    %26 = arith.index_cast %25 : i32 to index
    %c2 = arith.constant 2 : index
    %c0_11 = arith.constant 0 : index
    %27 = vector.load %arg3[%c0_10, %26, %c2, %c0_11] : memref<1x30x30x8xf32, #tpu.memory_space<vmem>>, vector<1x8x16x8xf32>
    %28 = vector.shape_cast %27 : vector<1x8x16x8xf32> to vector<8x16x8xf32>
    %29 = vector.shape_cast %24 : vector<8xf32> to vector<1x1x8xf32>
    %30 = vector.broadcast %29 : vector<1x1x8xf32> to vector<8x16x8xf32>
    %31 = arith.mulf %28, %30 : vector<8x16x8xf32>
    %32 = arith.addf %22, %31 : vector<8x16x8xf32>
    %33 = vector.extract_strided_slice %3 {offsets = [3, 0], sizes = [1, 8], strides = [1, 1]} : vector<15x8xf32> to vector<1x8xf32>
    %34 = vector.shape_cast %33 : vector<1x8xf32> to vector<8xf32>
    %c0_i32_12 = arith.constant 0 : i32
    %35 = arith.addi %1, %c0_i32_12 : i32
    %c0_13 = arith.constant 0 : index
    %36 = arith.index_cast %35 : i32 to index
    %c3 = arith.constant 3 : index
    %c0_14 = arith.constant 0 : index
    %37 = vector.load %arg3[%c0_13, %36, %c3, %c0_14] : memref<1x30x30x8xf32, #tpu.memory_space<vmem>>, vector<1x8x16x8xf32>
    %38 = vector.shape_cast %37 : vector<1x8x16x8xf32> to vector<8x16x8xf32>
    %39 = vector.shape_cast %34 : vector<8xf32> to vector<1x1x8xf32>
    %40 = vector.broadcast %39 : vector<1x1x8xf32> to vector<8x16x8xf32>
    %41 = arith.mulf %38, %40 : vector<8x16x8xf32>
    %42 = arith.addf %32, %41 : vector<8x16x8xf32>
    %43 = vector.extract_strided_slice %3 {offsets = [4, 0], sizes = [1, 8], strides = [1, 1]} : vector<15x8xf32> to vector<1x8xf32>
    %44 = vector.shape_cast %43 : vector<1x8xf32> to vector<8xf32>
    %c0_i32_15 = arith.constant 0 : i32
    %45 = arith.addi %1, %c0_i32_15 : i32
    %c0_16 = arith.constant 0 : index
    %46 = arith.index_cast %45 : i32 to index
    %c4 = arith.constant 4 : index
    %c0_17 = arith.constant 0 : index
    %47 = vector.load %arg3[%c0_16, %46, %c4, %c0_17] : memref<1x30x30x8xf32, #tpu.memory_space<vmem>>, vector<1x8x16x8xf32>
    %48 = vector.shape_cast %47 : vector<1x8x16x8xf32> to vector<8x16x8xf32>
    %49 = vector.shape_cast %44 : vector<8xf32> to vector<1x1x8xf32>
    %50 = vector.broadcast %49 : vector<1x1x8xf32> to vector<8x16x8xf32>
    %51 = arith.mulf %48, %50 : vector<8x16x8xf32>
    %52 = arith.addf %42, %51 : vector<8x16x8xf32>
    %53 = vector.extract_strided_slice %3 {offsets = [5, 0], sizes = [1, 8], strides = [1, 1]} : vector<15x8xf32> to vector<1x8xf32>
    %54 = vector.shape_cast %53 : vector<1x8xf32> to vector<8xf32>
    %c0_i32_18 = arith.constant 0 : i32
    %55 = arith.addi %1, %c0_i32_18 : i32
    %c0_19 = arith.constant 0 : index
    %56 = arith.index_cast %55 : i32 to index
    %c5 = arith.constant 5 : index
    %c0_20 = arith.constant 0 : index
    %57 = vector.load %arg3[%c0_19, %56, %c5, %c0_20] : memref<1x30x30x8xf32, #tpu.memory_space<vmem>>, vector<1x8x16x8xf32>
    %58 = vector.shape_cast %57 : vector<1x8x16x8xf32> to vector<8x16x8xf32>
    %59 = vector.shape_cast %54 : vector<8xf32> to vector<1x1x8xf32>
    %60 = vector.broadcast %59 : vector<1x1x8xf32> to vector<8x16x8xf32>
    %61 = arith.mulf %58, %60 : vector<8x16x8xf32>
    %62 = arith.addf %52, %61 : vector<8x16x8xf32>
    %63 = vector.extract_strided_slice %3 {offsets = [6, 0], sizes = [1, 8], strides = [1, 1]} : vector<15x8xf32> to vector<1x8xf32>
    %64 = vector.shape_cast %63 : vector<1x8xf32> to vector<8xf32>
    %c0_i32_21 = arith.constant 0 : i32
    %65 = arith.addi %1, %c0_i32_21 : i32
    %c0_22 = arith.constant 0 : index
    %66 = arith.index_cast %65 : i32 to index
    %c6 = arith.constant 6 : index
    %c0_23 = arith.constant 0 : index
    %67 = vector.load %arg3[%c0_22, %66, %c6, %c0_23] : memref<1x30x30x8xf32, #tpu.memory_space<vmem>>, vector<1x8x16x8xf32>
    %68 = vector.shape_cast %67 : vector<1x8x16x8xf32> to vector<8x16x8xf32>
    %69 = vector.shape_cast %64 : vector<8xf32> to vector<1x1x8xf32>
    %70 = vector.broadcast %69 : vector<1x1x8xf32> to vector<8x16x8xf32>
    %71 = arith.mulf %68, %70 : vector<8x16x8xf32>
    %72 = arith.addf %62, %71 : vector<8x16x8xf32>
    %73 = vector.extract_strided_slice %3 {offsets = [7, 0], sizes = [1, 8], strides = [1, 1]} : vector<15x8xf32> to vector<1x8xf32>
    %74 = vector.shape_cast %73 : vector<1x8xf32> to vector<8xf32>
    %c0_i32_24 = arith.constant 0 : i32
    %75 = arith.addi %1, %c0_i32_24 : i32
    %c0_25 = arith.constant 0 : index
    %76 = arith.index_cast %75 : i32 to index
    %c7 = arith.constant 7 : index
    %c0_26 = arith.constant 0 : index
    %77 = vector.load %arg3[%c0_25, %76, %c7, %c0_26] : memref<1x30x30x8xf32, #tpu.memory_space<vmem>>, vector<1x8x16x8xf32>
    %78 = vector.shape_cast %77 : vector<1x8x16x8xf32> to vector<8x16x8xf32>
    %79 = vector.shape_cast %74 : vector<8xf32> to vector<1x1x8xf32>
    %80 = vector.broadcast %79 : vector<1x1x8xf32> to vector<8x16x8xf32>
    %81 = arith.mulf %78, %80 : vector<8x16x8xf32>
    %82 = arith.addf %72, %81 : vector<8x16x8xf32>
    %83 = vector.extract_strided_slice %3 {offsets = [8, 0], sizes = [1, 8], strides = [1, 1]} : vector<15x8xf32> to vector<1x8xf32>
    %84 = vector.shape_cast %83 : vector<1x8xf32> to vector<8xf32>
    %c0_i32_27 = arith.constant 0 : i32
    %85 = arith.addi %1, %c0_i32_27 : i32
    %c0_28 = arith.constant 0 : index
    %86 = arith.index_cast %85 : i32 to index
    %c8 = arith.constant 8 : index
    %c0_29 = arith.constant 0 : index
    %87 = vector.load %arg3[%c0_28, %86, %c8, %c0_29] : memref<1x30x30x8xf32, #tpu.memory_space<vmem>>, vector<1x8x16x8xf32>
    %88 = vector.shape_cast %87 : vector<1x8x16x8xf32> to vector<8x16x8xf32>
    %89 = vector.shape_cast %84 : vector<8xf32> to vector<1x1x8xf32>
    %90 = vector.broadcast %89 : vector<1x1x8xf32> to vector<8x16x8xf32>
    %91 = arith.mulf %88, %90 : vector<8x16x8xf32>
    %92 = arith.addf %82, %91 : vector<8x16x8xf32>
    %93 = vector.extract_strided_slice %3 {offsets = [9, 0], sizes = [1, 8], strides = [1, 1]} : vector<15x8xf32> to vector<1x8xf32>
    %94 = vector.shape_cast %93 : vector<1x8xf32> to vector<8xf32>
    %c0_i32_30 = arith.constant 0 : i32
    %95 = arith.addi %1, %c0_i32_30 : i32
    %c0_31 = arith.constant 0 : index
    %96 = arith.index_cast %95 : i32 to index
    %c9 = arith.constant 9 : index
    %c0_32 = arith.constant 0 : index
    %97 = vector.load %arg3[%c0_31, %96, %c9, %c0_32] : memref<1x30x30x8xf32, #tpu.memory_space<vmem>>, vector<1x8x16x8xf32>
    %98 = vector.shape_cast %97 : vector<1x8x16x8xf32> to vector<8x16x8xf32>
    %99 = vector.shape_cast %94 : vector<8xf32> to vector<1x1x8xf32>
    %100 = vector.broadcast %99 : vector<1x1x8xf32> to vector<8x16x8xf32>
    %101 = arith.mulf %98, %100 : vector<8x16x8xf32>
    %102 = arith.addf %92, %101 : vector<8x16x8xf32>
    %103 = vector.extract_strided_slice %3 {offsets = [10, 0], sizes = [1, 8], strides = [1, 1]} : vector<15x8xf32> to vector<1x8xf32>
    %104 = vector.shape_cast %103 : vector<1x8xf32> to vector<8xf32>
    %c0_i32_33 = arith.constant 0 : i32
    %105 = arith.addi %1, %c0_i32_33 : i32
    %c0_34 = arith.constant 0 : index
    %106 = arith.index_cast %105 : i32 to index
    %c10 = arith.constant 10 : index
    %c0_35 = arith.constant 0 : index
    %107 = vector.load %arg3[%c0_34, %106, %c10, %c0_35] : memref<1x30x30x8xf32, #tpu.memory_space<vmem>>, vector<1x8x16x8xf32>
    %108 = vector.shape_cast %107 : vector<1x8x16x8xf32> to vector<8x16x8xf32>
    %109 = vector.shape_cast %104 : vector<8xf32> to vector<1x1x8xf32>
    %110 = vector.broadcast %109 : vector<1x1x8xf32> to vector<8x16x8xf32>
    %111 = arith.mulf %108, %110 : vector<8x16x8xf32>
    %112 = arith.addf %102, %111 : vector<8x16x8xf32>
    %113 = vector.extract_strided_slice %3 {offsets = [11, 0], sizes = [1, 8], strides = [1, 1]} : vector<15x8xf32> to vector<1x8xf32>
    %114 = vector.shape_cast %113 : vector<1x8xf32> to vector<8xf32>
    %c0_i32_36 = arith.constant 0 : i32
    %115 = arith.addi %1, %c0_i32_36 : i32
    %c0_37 = arith.constant 0 : index
    %116 = arith.index_cast %115 : i32 to index
    %c11 = arith.constant 11 : index
    %c0_38 = arith.constant 0 : index
    %117 = vector.load %arg3[%c0_37, %116, %c11, %c0_38] : memref<1x30x30x8xf32, #tpu.memory_space<vmem>>, vector<1x8x16x8xf32>
    %118 = vector.shape_cast %117 : vector<1x8x16x8xf32> to vector<8x16x8xf32>
    %119 = vector.shape_cast %114 : vector<8xf32> to vector<1x1x8xf32>
    %120 = vector.broadcast %119 : vector<1x1x8xf32> to vector<8x16x8xf32>
    %121 = arith.mulf %118, %120 : vector<8x16x8xf32>
    %122 = arith.addf %112, %121 : vector<8x16x8xf32>
    %123 = vector.extract_strided_slice %3 {offsets = [12, 0], sizes = [1, 8], strides = [1, 1]} : vector<15x8xf32> to vector<1x8xf32>
    %124 = vector.shape_cast %123 : vector<1x8xf32> to vector<8xf32>
    %c0_i32_39 = arith.constant 0 : i32
    %125 = arith.addi %1, %c0_i32_39 : i32
    %c0_40 = arith.constant 0 : index
    %126 = arith.index_cast %125 : i32 to index
    %c12 = arith.constant 12 : index
    %c0_41 = arith.constant 0 : index
    %127 = vector.load %arg3[%c0_40, %126, %c12, %c0_41] : memref<1x30x30x8xf32, #tpu.memory_space<vmem>>, vector<1x8x16x8xf32>
    %128 = vector.shape_cast %127 : vector<1x8x16x8xf32> to vector<8x16x8xf32>
    %129 = vector.shape_cast %124 : vector<8xf32> to vector<1x1x8xf32>
    %130 = vector.broadcast %129 : vector<1x1x8xf32> to vector<8x16x8xf32>
    %131 = arith.mulf %128, %130 : vector<8x16x8xf32>
    %132 = arith.addf %122, %131 : vector<8x16x8xf32>
    %133 = vector.extract_strided_slice %3 {offsets = [13, 0], sizes = [1, 8], strides = [1, 1]} : vector<15x8xf32> to vector<1x8xf32>
    %134 = vector.shape_cast %133 : vector<1x8xf32> to vector<8xf32>
    %c0_i32_42 = arith.constant 0 : i32
    %135 = arith.addi %1, %c0_i32_42 : i32
    %c0_43 = arith.constant 0 : index
    %136 = arith.index_cast %135 : i32 to index
    %c13 = arith.constant 13 : index
    %c0_44 = arith.constant 0 : index
    %137 = vector.load %arg3[%c0_43, %136, %c13, %c0_44] : memref<1x30x30x8xf32, #tpu.memory_space<vmem>>, vector<1x8x16x8xf32>
    %138 = vector.shape_cast %137 : vector<1x8x16x8xf32> to vector<8x16x8xf32>
    %139 = vector.shape_cast %134 : vector<8xf32> to vector<1x1x8xf32>
    %140 = vector.broadcast %139 : vector<1x1x8xf32> to vector<8x16x8xf32>
    %141 = arith.mulf %138, %140 : vector<8x16x8xf32>
    %142 = arith.addf %132, %141 : vector<8x16x8xf32>
    %143 = vector.extract_strided_slice %3 {offsets = [14, 0], sizes = [1, 8], strides = [1, 1]} : vector<15x8xf32> to vector<1x8xf32>
    %144 = vector.shape_cast %143 : vector<1x8xf32> to vector<8xf32>
    %c0_i32_45 = arith.constant 0 : i32
    %145 = arith.addi %1, %c0_i32_45 : i32
    %c0_46 = arith.constant 0 : index
    %146 = arith.index_cast %145 : i32 to index
    %c14 = arith.constant 14 : index
    %c0_47 = arith.constant 0 : index
    %147 = vector.load %arg3[%c0_46, %146, %c14, %c0_47] : memref<1x30x30x8xf32, #tpu.memory_space<vmem>>, vector<1x8x16x8xf32>
    %148 = vector.shape_cast %147 : vector<1x8x16x8xf32> to vector<8x16x8xf32>
    %149 = vector.shape_cast %144 : vector<8xf32> to vector<1x1x8xf32>
    %150 = vector.broadcast %149 : vector<1x1x8xf32> to vector<8x16x8xf32>
    %151 = arith.mulf %148, %150 : vector<8x16x8xf32>
    %152 = arith.addf %142, %151 : vector<8x16x8xf32>
    %c1_i32 = arith.constant 1 : i32
    %c14_i32 = arith.constant 14 : i32
    %153 = arith.addi %c1_i32, %c14_i32 : i32
    %c1_i32_48 = arith.constant 1 : i32
    %154 = scf.for %arg5 = %c1_i32 to %153 step %c1_i32_48 iter_args(%arg6 = %152) -> (vector<8x16x8xf32>)  : i32 {
      %c0_54 = arith.constant 0 : index
      %158 = arith.index_cast %arg5 : i32 to index
      %c0_55 = arith.constant 0 : index
      %c0_56 = arith.constant 0 : index
      %159 = vector.load %arg2[%c0_54, %158, %c0_55, %c0_56] : memref<1x15x15x8xf32, #tpu.memory_space<vmem>>, vector<1x1x15x8xf32>
      %160 = vector.shape_cast %159 : vector<1x1x15x8xf32> to vector<15x8xf32>
      %161 = vector.extract_strided_slice %160 {offsets = [0, 0], sizes = [1, 8], strides = [1, 1]} : vector<15x8xf32> to vector<1x8xf32>
      %162 = vector.shape_cast %161 : vector<1x8xf32> to vector<8xf32>
      %163 = arith.addi %1, %arg5 : i32
      %c0_57 = arith.constant 0 : index
      %164 = arith.index_cast %163 : i32 to index
      %c0_58 = arith.constant 0 : index
      %c0_59 = arith.constant 0 : index
      %165 = vector.load %arg3[%c0_57, %164, %c0_58, %c0_59] : memref<1x30x30x8xf32, #tpu.memory_space<vmem>>, vector<1x8x16x8xf32>
      %166 = vector.shape_cast %165 : vector<1x8x16x8xf32> to vector<8x16x8xf32>
      %167 = vector.shape_cast %162 : vector<8xf32> to vector<1x1x8xf32>
      %168 = vector.broadcast %167 : vector<1x1x8xf32> to vector<8x16x8xf32>
      %169 = arith.mulf %166, %168 : vector<8x16x8xf32>
      %170 = arith.addf %arg6, %169 : vector<8x16x8xf32>
      %171 = vector.extract_strided_slice %160 {offsets = [1, 0], sizes = [1, 8], strides = [1, 1]} : vector<15x8xf32> to vector<1x8xf32>
      %172 = vector.shape_cast %171 : vector<1x8xf32> to vector<8xf32>
      %173 = arith.addi %1, %arg5 : i32
      %c0_60 = arith.constant 0 : index
      %174 = arith.index_cast %173 : i32 to index
      %c1_61 = arith.constant 1 : index
      %c0_62 = arith.constant 0 : index
      %175 = vector.load %arg3[%c0_60, %174, %c1_61, %c0_62] : memref<1x30x30x8xf32, #tpu.memory_space<vmem>>, vector<1x8x16x8xf32>
      %176 = vector.shape_cast %175 : vector<1x8x16x8xf32> to vector<8x16x8xf32>
      %177 = vector.shape_cast %172 : vector<8xf32> to vector<1x1x8xf32>
      %178 = vector.broadcast %177 : vector<1x1x8xf32> to vector<8x16x8xf32>
      %179 = arith.mulf %176, %178 : vector<8x16x8xf32>
      %180 = arith.addf %170, %179 : vector<8x16x8xf32>
      %181 = vector.extract_strided_slice %160 {offsets = [2, 0], sizes = [1, 8], strides = [1, 1]} : vector<15x8xf32> to vector<1x8xf32>
      %182 = vector.shape_cast %181 : vector<1x8xf32> to vector<8xf32>
      %183 = arith.addi %1, %arg5 : i32
      %c0_63 = arith.constant 0 : index
      %184 = arith.index_cast %183 : i32 to index
      %c2_64 = arith.constant 2 : index
      %c0_65 = arith.constant 0 : index
      %185 = vector.load %arg3[%c0_63, %184, %c2_64, %c0_65] : memref<1x30x30x8xf32, #tpu.memory_space<vmem>>, vector<1x8x16x8xf32>
      %186 = vector.shape_cast %185 : vector<1x8x16x8xf32> to vector<8x16x8xf32>
      %187 = vector.shape_cast %182 : vector<8xf32> to vector<1x1x8xf32>
      %188 = vector.broadcast %187 : vector<1x1x8xf32> to vector<8x16x8xf32>
      %189 = arith.mulf %186, %188 : vector<8x16x8xf32>
      %190 = arith.addf %180, %189 : vector<8x16x8xf32>
      %191 = vector.extract_strided_slice %160 {offsets = [3, 0], sizes = [1, 8], strides = [1, 1]} : vector<15x8xf32> to vector<1x8xf32>
      %192 = vector.shape_cast %191 : vector<1x8xf32> to vector<8xf32>
      %193 = arith.addi %1, %arg5 : i32
      %c0_66 = arith.constant 0 : index
      %194 = arith.index_cast %193 : i32 to index
      %c3_67 = arith.constant 3 : index
      %c0_68 = arith.constant 0 : index
      %195 = vector.load %arg3[%c0_66, %194, %c3_67, %c0_68] : memref<1x30x30x8xf32, #tpu.memory_space<vmem>>, vector<1x8x16x8xf32>
      %196 = vector.shape_cast %195 : vector<1x8x16x8xf32> to vector<8x16x8xf32>
      %197 = vector.shape_cast %192 : vector<8xf32> to vector<1x1x8xf32>
      %198 = vector.broadcast %197 : vector<1x1x8xf32> to vector<8x16x8xf32>
      %199 = arith.mulf %196, %198 : vector<8x16x8xf32>
      %200 = arith.addf %190, %199 : vector<8x16x8xf32>
      %201 = vector.extract_strided_slice %160 {offsets = [4, 0], sizes = [1, 8], strides = [1, 1]} : vector<15x8xf32> to vector<1x8xf32>
      %202 = vector.shape_cast %201 : vector<1x8xf32> to vector<8xf32>
      %203 = arith.addi %1, %arg5 : i32
      %c0_69 = arith.constant 0 : index
      %204 = arith.index_cast %203 : i32 to index
      %c4_70 = arith.constant 4 : index
      %c0_71 = arith.constant 0 : index
      %205 = vector.load %arg3[%c0_69, %204, %c4_70, %c0_71] : memref<1x30x30x8xf32, #tpu.memory_space<vmem>>, vector<1x8x16x8xf32>
      %206 = vector.shape_cast %205 : vector<1x8x16x8xf32> to vector<8x16x8xf32>
      %207 = vector.shape_cast %202 : vector<8xf32> to vector<1x1x8xf32>
      %208 = vector.broadcast %207 : vector<1x1x8xf32> to vector<8x16x8xf32>
      %209 = arith.mulf %206, %208 : vector<8x16x8xf32>
      %210 = arith.addf %200, %209 : vector<8x16x8xf32>
      %211 = vector.extract_strided_slice %160 {offsets = [5, 0], sizes = [1, 8], strides = [1, 1]} : vector<15x8xf32> to vector<1x8xf32>
      %212 = vector.shape_cast %211 : vector<1x8xf32> to vector<8xf32>
      %213 = arith.addi %1, %arg5 : i32
      %c0_72 = arith.constant 0 : index
      %214 = arith.index_cast %213 : i32 to index
      %c5_73 = arith.constant 5 : index
      %c0_74 = arith.constant 0 : index
      %215 = vector.load %arg3[%c0_72, %214, %c5_73, %c0_74] : memref<1x30x30x8xf32, #tpu.memory_space<vmem>>, vector<1x8x16x8xf32>
      %216 = vector.shape_cast %215 : vector<1x8x16x8xf32> to vector<8x16x8xf32>
      %217 = vector.shape_cast %212 : vector<8xf32> to vector<1x1x8xf32>
      %218 = vector.broadcast %217 : vector<1x1x8xf32> to vector<8x16x8xf32>
      %219 = arith.mulf %216, %218 : vector<8x16x8xf32>
      %220 = arith.addf %210, %219 : vector<8x16x8xf32>
      %221 = vector.extract_strided_slice %160 {offsets = [6, 0], sizes = [1, 8], strides = [1, 1]} : vector<15x8xf32> to vector<1x8xf32>
      %222 = vector.shape_cast %221 : vector<1x8xf32> to vector<8xf32>
      %223 = arith.addi %1, %arg5 : i32
      %c0_75 = arith.constant 0 : index
      %224 = arith.index_cast %223 : i32 to index
      %c6_76 = arith.constant 6 : index
      %c0_77 = arith.constant 0 : index
      %225 = vector.load %arg3[%c0_75, %224, %c6_76, %c0_77] : memref<1x30x30x8xf32, #tpu.memory_space<vmem>>, vector<1x8x16x8xf32>
      %226 = vector.shape_cast %225 : vector<1x8x16x8xf32> to vector<8x16x8xf32>
      %227 = vector.shape_cast %222 : vector<8xf32> to vector<1x1x8xf32>
      %228 = vector.broadcast %227 : vector<1x1x8xf32> to vector<8x16x8xf32>
      %229 = arith.mulf %226, %228 : vector<8x16x8xf32>
      %230 = arith.addf %220, %229 : vector<8x16x8xf32>
      %231 = vector.extract_strided_slice %160 {offsets = [7, 0], sizes = [1, 8], strides = [1, 1]} : vector<15x8xf32> to vector<1x8xf32>
      %232 = vector.shape_cast %231 : vector<1x8xf32> to vector<8xf32>
      %233 = arith.addi %1, %arg5 : i32
      %c0_78 = arith.constant 0 : index
      %234 = arith.index_cast %233 : i32 to index
      %c7_79 = arith.constant 7 : index
      %c0_80 = arith.constant 0 : index
      %235 = vector.load %arg3[%c0_78, %234, %c7_79, %c0_80] : memref<1x30x30x8xf32, #tpu.memory_space<vmem>>, vector<1x8x16x8xf32>
      %236 = vector.shape_cast %235 : vector<1x8x16x8xf32> to vector<8x16x8xf32>
      %237 = vector.shape_cast %232 : vector<8xf32> to vector<1x1x8xf32>
      %238 = vector.broadcast %237 : vector<1x1x8xf32> to vector<8x16x8xf32>
      %239 = arith.mulf %236, %238 : vector<8x16x8xf32>
      %240 = arith.addf %230, %239 : vector<8x16x8xf32>
      %241 = vector.extract_strided_slice %160 {offsets = [8, 0], sizes = [1, 8], strides = [1, 1]} : vector<15x8xf32> to vector<1x8xf32>
      %242 = vector.shape_cast %241 : vector<1x8xf32> to vector<8xf32>
      %243 = arith.addi %1, %arg5 : i32
      %c0_81 = arith.constant 0 : index
      %244 = arith.index_cast %243 : i32 to index
      %c8_82 = arith.constant 8 : index
      %c0_83 = arith.constant 0 : index
      %245 = vector.load %arg3[%c0_81, %244, %c8_82, %c0_83] : memref<1x30x30x8xf32, #tpu.memory_space<vmem>>, vector<1x8x16x8xf32>
      %246 = vector.shape_cast %245 : vector<1x8x16x8xf32> to vector<8x16x8xf32>
      %247 = vector.shape_cast %242 : vector<8xf32> to vector<1x1x8xf32>
      %248 = vector.broadcast %247 : vector<1x1x8xf32> to vector<8x16x8xf32>
      %249 = arith.mulf %246, %248 : vector<8x16x8xf32>
      %250 = arith.addf %240, %249 : vector<8x16x8xf32>
      %251 = vector.extract_strided_slice %160 {offsets = [9, 0], sizes = [1, 8], strides = [1, 1]} : vector<15x8xf32> to vector<1x8xf32>
      %252 = vector.shape_cast %251 : vector<1x8xf32> to vector<8xf32>
      %253 = arith.addi %1, %arg5 : i32
      %c0_84 = arith.constant 0 : index
      %254 = arith.index_cast %253 : i32 to index
      %c9_85 = arith.constant 9 : index
      %c0_86 = arith.constant 0 : index
      %255 = vector.load %arg3[%c0_84, %254, %c9_85, %c0_86] : memref<1x30x30x8xf32, #tpu.memory_space<vmem>>, vector<1x8x16x8xf32>
      %256 = vector.shape_cast %255 : vector<1x8x16x8xf32> to vector<8x16x8xf32>
      %257 = vector.shape_cast %252 : vector<8xf32> to vector<1x1x8xf32>
      %258 = vector.broadcast %257 : vector<1x1x8xf32> to vector<8x16x8xf32>
      %259 = arith.mulf %256, %258 : vector<8x16x8xf32>
      %260 = arith.addf %250, %259 : vector<8x16x8xf32>
      %261 = vector.extract_strided_slice %160 {offsets = [10, 0], sizes = [1, 8], strides = [1, 1]} : vector<15x8xf32> to vector<1x8xf32>
      %262 = vector.shape_cast %261 : vector<1x8xf32> to vector<8xf32>
      %263 = arith.addi %1, %arg5 : i32
      %c0_87 = arith.constant 0 : index
      %264 = arith.index_cast %263 : i32 to index
      %c10_88 = arith.constant 10 : index
      %c0_89 = arith.constant 0 : index
      %265 = vector.load %arg3[%c0_87, %264, %c10_88, %c0_89] : memref<1x30x30x8xf32, #tpu.memory_space<vmem>>, vector<1x8x16x8xf32>
      %266 = vector.shape_cast %265 : vector<1x8x16x8xf32> to vector<8x16x8xf32>
      %267 = vector.shape_cast %262 : vector<8xf32> to vector<1x1x8xf32>
      %268 = vector.broadcast %267 : vector<1x1x8xf32> to vector<8x16x8xf32>
      %269 = arith.mulf %266, %268 : vector<8x16x8xf32>
      %270 = arith.addf %260, %269 : vector<8x16x8xf32>
      %271 = vector.extract_strided_slice %160 {offsets = [11, 0], sizes = [1, 8], strides = [1, 1]} : vector<15x8xf32> to vector<1x8xf32>
      %272 = vector.shape_cast %271 : vector<1x8xf32> to vector<8xf32>
      %273 = arith.addi %1, %arg5 : i32
      %c0_90 = arith.constant 0 : index
      %274 = arith.index_cast %273 : i32 to index
      %c11_91 = arith.constant 11 : index
      %c0_92 = arith.constant 0 : index
      %275 = vector.load %arg3[%c0_90, %274, %c11_91, %c0_92] : memref<1x30x30x8xf32, #tpu.memory_space<vmem>>, vector<1x8x16x8xf32>
      %276 = vector.shape_cast %275 : vector<1x8x16x8xf32> to vector<8x16x8xf32>
      %277 = vector.shape_cast %272 : vector<8xf32> to vector<1x1x8xf32>
      %278 = vector.broadcast %277 : vector<1x1x8xf32> to vector<8x16x8xf32>
      %279 = arith.mulf %276, %278 : vector<8x16x8xf32>
      %280 = arith.addf %270, %279 : vector<8x16x8xf32>
      %281 = vector.extract_strided_slice %160 {offsets = [12, 0], sizes = [1, 8], strides = [1, 1]} : vector<15x8xf32> to vector<1x8xf32>
      %282 = vector.shape_cast %281 : vector<1x8xf32> to vector<8xf32>
      %283 = arith.addi %1, %arg5 : i32
      %c0_93 = arith.constant 0 : index
      %284 = arith.index_cast %283 : i32 to index
      %c12_94 = arith.constant 12 : index
      %c0_95 = arith.constant 0 : index
      %285 = vector.load %arg3[%c0_93, %284, %c12_94, %c0_95] : memref<1x30x30x8xf32, #tpu.memory_space<vmem>>, vector<1x8x16x8xf32>
      %286 = vector.shape_cast %285 : vector<1x8x16x8xf32> to vector<8x16x8xf32>
      %287 = vector.shape_cast %282 : vector<8xf32> to vector<1x1x8xf32>
      %288 = vector.broadcast %287 : vector<1x1x8xf32> to vector<8x16x8xf32>
      %289 = arith.mulf %286, %288 : vector<8x16x8xf32>
      %290 = arith.addf %280, %289 : vector<8x16x8xf32>
      %291 = vector.extract_strided_slice %160 {offsets = [13, 0], sizes = [1, 8], strides = [1, 1]} : vector<15x8xf32> to vector<1x8xf32>
      %292 = vector.shape_cast %291 : vector<1x8xf32> to vector<8xf32>
      %293 = arith.addi %1, %arg5 : i32
      %c0_96 = arith.constant 0 : index
      %294 = arith.index_cast %293 : i32 to index
      %c13_97 = arith.constant 13 : index
      %c0_98 = arith.constant 0 : index
      %295 = vector.load %arg3[%c0_96, %294, %c13_97, %c0_98] : memref<1x30x30x8xf32, #tpu.memory_space<vmem>>, vector<1x8x16x8xf32>
      %296 = vector.shape_cast %295 : vector<1x8x16x8xf32> to vector<8x16x8xf32>
      %297 = vector.shape_cast %292 : vector<8xf32> to vector<1x1x8xf32>
      %298 = vector.broadcast %297 : vector<1x1x8xf32> to vector<8x16x8xf32>
      %299 = arith.mulf %296, %298 : vector<8x16x8xf32>
      %300 = arith.addf %290, %299 : vector<8x16x8xf32>
      %301 = vector.extract_strided_slice %160 {offsets = [14, 0], sizes = [1, 8], strides = [1, 1]} : vector<15x8xf32> to vector<1x8xf32>
      %302 = vector.shape_cast %301 : vector<1x8xf32> to vector<8xf32>
      %303 = arith.addi %1, %arg5 : i32
      %c0_99 = arith.constant 0 : index
      %304 = arith.index_cast %303 : i32 to index
      %c14_100 = arith.constant 14 : index
      %c0_101 = arith.constant 0 : index
      %305 = vector.load %arg3[%c0_99, %304, %c14_100, %c0_101] : memref<1x30x30x8xf32, #tpu.memory_space<vmem>>, vector<1x8x16x8xf32>
      %306 = vector.shape_cast %305 : vector<1x8x16x8xf32> to vector<8x16x8xf32>
      %307 = vector.shape_cast %302 : vector<8xf32> to vector<1x1x8xf32>
      %308 = vector.broadcast %307 : vector<1x1x8xf32> to vector<8x16x8xf32>
      %309 = arith.mulf %306, %308 : vector<8x16x8xf32>
      %310 = arith.addf %300, %309 : vector<8x16x8xf32>
      scf.yield %310 : vector<8x16x8xf32>
    }
    %c14_i32_49 = arith.constant 14 : i32
    %c0_50 = arith.constant 0 : index
    %c0_51 = arith.constant 0 : index
    %c0_52 = arith.constant 0 : index
    %c0_53 = arith.constant 0 : index
    %155 = vector.load %arg4[%c0_50, %c0_51, %c0_52, %c0_53] : memref<1x8x16x8xf32, #tpu.memory_space<vmem>>, vector<1x8x16x8xf32>
    %156 = vector.shape_cast %155 : vector<1x8x16x8xf32> to vector<8x16x8xf32>
    %157 = vector.shape_cast %154 : vector<8x16x8xf32> to vector<1x8x16x8xf32>
    tpu.vector_store %arg4[%c0_50, %c0_51, %c0_52, %c0_53], %157 {strides = array<i32>} : memref<1x8x16x8xf32, #tpu.memory_space<vmem>>, vector<1x8x16x8xf32>,
    return
  }
  func.func @transform_0(%arg0: i32, %arg1: i32) -> (i32, i32, i32, i32) {
    %c0_i32 = arith.constant 0 : i32
    %c0_i32_0 = arith.constant 0 : i32
    %c0_i32_1 = arith.constant 0 : i32
    %c0_i32_2 = arith.constant 0 : i32
    return %arg0, %c0_i32, %c0_i32_0, %c0_i32_1 : i32, i32, i32, i32
  }
  func.func @transform_1(%arg0: i32, %arg1: i32) -> (i32, i32, i32, i32) {
    %c0_i32 = arith.constant 0 : i32
    %c0_i32_0 = arith.constant 0 : i32
    %c0_i32_1 = arith.constant 0 : i32
    %c0_i32_2 = arith.constant 0 : i32
    return %arg0, %c0_i32, %c0_i32_0, %c0_i32_1 : i32, i32, i32, i32
  }
  func.func @transform_2(%arg0: i32, %arg1: i32) -> (i32, i32, i32, i32) {
    %c0_i32 = arith.constant 0 : i32
    %c0_i32_0 = arith.constant 0 : i32
    %c0_i32_1 = arith.constant 0 : i32
    return %arg0, %arg1, %c0_i32, %c0_i32_0 : i32, i32, i32, i32
  }
}

</mosaic_0001>

<llo_original>
// kernel: tpu_custom_call.1
$region0: #{tpu_custom_call.1}
  #allocation0 [shape = 'u32[]', space=smem, size = 0x4, offset = 0x4, fixed_abs, tag = 'smem constant byte address 0x4 - core index']
  #allocation1 [shape = 'u32[144,128]{1,0:T(1,128)}', space=vmem, size = 0x12000, scoped, tag = 'internal scratch']
  %s0 = inlined_call_operand.vmem [shape: f32[1,15,15,8], index: 0, kind: input, shape index: {}]
  %s1 = inlined_call_operand.vmem [shape: f32[1,30,30,8], index: 1, kind: input, shape index: {}]
  %s2 = inlined_call_operand.vmem [shape: f32[1,16,16,8], index: 2, kind: output, shape index: {}]
  %s3 = sld [smem:[#allocation0]]
  $region48: #{tpu_custom_call.1} parent=0
    _
  %s5 = ssub.s32 1, %s3
  %s6 = scalar_select 0, %s5, %s3
  loop: start=0, step=1, limit=4
  $region2: #{tpu_custom_call.1} parent=0 // loop_pre_header
    _
  $region3: #{tpu_custom_call.1} parent=0 // loop_header
    %s8 = sphi 0, %s12
    %p9 = scmp.ge.s32.totalorder %s8, 4
    %s15 = sphi 0, %s27
    %s16 = sphi 0, %s23
    %s17 = sphi 0, %s15
    %s18 = sphi 0, %s16
    %s19 = sphi 0, %s17
    %s20 = sphi 0, %s18
    %s30 = sphi 0, %s32
    %s33 = sphi 0, %s30
    %s34 = sphi 0, %s33
    %s50 = sphi 0, %s34
    %s56 = sphi 0, %s58
    %s59 = sphi 0, %s56
    %s60 = sphi 0, %s59
    %s76 = sphi 0, %s60
    %s84 = sphi 0, %s86
    %s87 = sphi 0, %s84
    %s88 = sphi 0, %s87
    %s104 = sphi 0, %s88
  $region4: #{tpu_custom_call.1} parent=0 // loop_header_branch
    %11 = sbr.rel (%p9) target = $region8
  $region5: #{tpu_custom_call.1} parent=0 // loop_body
    %s13 = ssub.s32 %s8, 1
    %s14 = ssub.s32 %s8, 2
    %s21 = sadd.s32 1, %s16
    %p22 = scmp.ge.s32.totalorder %s21, 2
    %s23 = scalar_select %p22, 0, %s21
    %s24 = sadd.s32 1, %s15
    %s25 = scalar_select %p22, %s24, %s15
    %p26 = scmp.ge.s32.totalorder %s25, 1
    %s27 = scalar_select %p26, 0, %s25
    %s28 = ssub.s32 %s15, %s27
    %p29 = scmp.eq.s32.totalorder %s28, 0
    %s31 = sadd.s32 %s30, 1
    %s32 = scalar_select %p29, %s30, %s31
    %p35 = pneg %p29
    %p36 = scmp.eq.s32.totalorder %s8, 1
    %p37 = por %p35, %p36
    %p38 = scmp.ne.s32.totalorder %s30, %s33
    %p39 = scmp.eq.s32.totalorder %s8, 0
    %p40 = por %p38, %p39
    %p41 = scmp.ne.s32.totalorder %s30, %s33
    %p42 = scmp.eq.s32.totalorder %s13, 1
    %p43 = por %p41, %p42
    %p44 = scmp.ne.s32.totalorder %s33, %s34
    %p45 = scmp.eq.s32.totalorder %s13, 0
    %p46 = por %p44, %p45
    %p47 = scmp.ne.s32.totalorder %s33, %s34
    %p48 = scmp.eq.s32.totalorder %s14, 1
    %p49 = por %p47, %p48
    %p51 = scmp.ne.s32.totalorder %s34, %s50
    %p52 = scmp.eq.s32.totalorder %s14, 0
    %p53 = por %p51, %p52
    %s54 = ssub.s32 %s15, %s27
    %p55 = scmp.eq.s32.totalorder %s54, 0
    %s57 = sadd.s32 %s56, 1
    %s58 = scalar_select %p55, %s56, %s57
    %p61 = pneg %p55
    %p62 = scmp.eq.s32.totalorder %s8, 1
    %p63 = por %p61, %p62
    %p64 = scmp.ne.s32.totalorder %s56, %s59
    %p65 = scmp.eq.s32.totalorder %s8, 0
    %p66 = por %p64, %p65
    %p67 = scmp.ne.s32.totalorder %s56, %s59
    %p68 = scmp.eq.s32.totalorder %s13, 1
    %p69 = por %p67, %p68
    %p70 = scmp.ne.s32.totalorder %s59, %s60
    %p71 = scmp.eq.s32.totalorder %s13, 0
    %p72 = por %p70, %p71
    %p73 = scmp.ne.s32.totalorder %s59, %s60
    %p74 = scmp.eq.s32.totalorder %s14, 1
    %p75 = por %p73, %p74
    %p77 = scmp.ne.s32.totalorder %s60, %s76
    %p78 = scmp.eq.s32.totalorder %s14, 0
    %p79 = por %p77, %p78
    %s80 = ssub.s32 %s15, %s27
    %s81 = ssub.s32 %s16, %s23
    %s82 = sor.u32 %s80, %s81
    %p83 = scmp.eq.s32.totalorder %s82, 0
    %s85 = sadd.s32 %s84, 1
    %s86 = scalar_select %p83, %s84, %s85
    %p89 = pneg %p83
    %p90 = scmp.eq.s32.totalorder %s8, 1
    %p91 = por %p89, %p90
    %p92 = scmp.ne.s32.totalorder %s84, %s87
    %p93 = scmp.eq.s32.totalorder %s8, 0
    %p94 = por %p92, %p93
    %p95 = scmp.ne.s32.totalorder %s84, %s87
    %p96 = scmp.eq.s32.totalorder %s13, 1
    %p97 = por %p95, %p96
    %p98 = scmp.ne.s32.totalorder %s87, %s88
    %p99 = scmp.eq.s32.totalorder %s13, 0
    %p100 = por %p98, %p99
    %p101 = scmp.ne.s32.totalorder %s87, %s88
    %p102 = scmp.eq.s32.totalorder %s14, 1
    %p103 = por %p101, %p102
    %p105 = scmp.ne.s32.totalorder %s88, %s104
    %p106 = scmp.eq.s32.totalorder %s14, 0
    %p107 = por %p105, %p106
    %p108 = scmp.le.s32.totalorder 1, %s8
    %p109 = scmp.lt.s32.totalorder %s8, 3
    %p110 = pnand %p108, %p109
    %p111 = pneg %p110
    // Predicated region
    $region9: #{tpu_custom_call.1} parent=5 // pred_check
      _
    $region10: #{tpu_custom_call.1} parent=5 // pred_check_branch
      %113 = sbr.rel (%p110) target = $region12
    $region11: #{tpu_custom_call.1} parent=5 // pred_region
      %s114 = ssub.s32 %s8, 1
      // Predicated region
      $region13: #{tpu_custom_call.1} parent=11 // pred_check
        %p115 = pneg %p46
      $region14: #{tpu_custom_call.1} parent=11 // pred_check_branch
        %117 = sbr.rel (%p115) target = $region16
      $region15: #{tpu_custom_call.1} parent=11 // pred_region
        %p118 = scmp.lt.s32.totalorder %s17, 0
        %s119 = scalar_select %p118, %s17, 0
        %s120 = smul.addr %s119, 30
        %s121 = smul.addr %s120, 8
        %s122 = scalar_lea.vmem %s0, %s121
      $region16: #{tpu_custom_call.1} parent=11 // pred_fallthru
        _
      // Predicated region
      $region17: #{tpu_custom_call.1} parent=11 // pred_check
        %p123 = pneg %p72
      $region18: #{tpu_custom_call.1} parent=11 // pred_check_branch
        %125 = sbr.rel (%p123) target = $region20
      $region19: #{tpu_custom_call.1} parent=11 // pred_region
        %p126 = scmp.lt.s32.totalorder %s17, 0
        %s127 = scalar_select %p126, %s17, 0
        %s128 = smul.addr %s127, 120
        %s129 = smul.addr %s128, 8
        %s130 = scalar_lea.vmem %s1, %s129
      $region20: #{tpu_custom_call.1} parent=11 // pred_fallthru
        _
    $region12: #{tpu_custom_call.1} parent=5 // pred_fallthru
      _
    %p131 = scmp.lt.s32.totalorder %s8, 2
    // Predicated region
    $region21: #{tpu_custom_call.1} parent=5 // pred_check
      %p132 = pneg %p131
    $region22: #{tpu_custom_call.1} parent=5 // pred_check_branch
      %134 = sbr.rel (%p132) target = $region24
    $region23: #{tpu_custom_call.1} parent=5 // pred_region
      _
    $region24: #{tpu_custom_call.1} parent=5 // pred_fallthru
      _
    %p135 = scmp.le.s32.totalorder 1, %s8
    %p136 = scmp.lt.s32.totalorder %s8, 3
    %p137 = pnand %p135, %p136
    %p138 = pneg %p137
    // Predicated region
    $region25: #{tpu_custom_call.1} parent=5 // pred_check
      _
    $region26: #{tpu_custom_call.1} parent=5 // pred_check_branch
      %140 = sbr.rel (%p137) target = $region28
    $region27: #{tpu_custom_call.1} parent=5 // pred_region
      %s141 = ssub.s32 %s8, 1
      %p142 = scmp.lt.s32.totalorder %s17, 0
      %s143 = scalar_select %p142, %s17, 0
      %s144 = smul.addr %s143, 30
      %s145 = smul.addr %s144, 8
      %s146 = scalar_lea.vmem %s0, %s145
      %p147 = pneg %p46
      %p148 = pneg %p43
      %p149 = scmp.lt.s32.totalorder %s17, 0
      %s150 = scalar_select %p149, %s17, 0
      %s151 = smul.addr %s150, 120
      %s152 = smul.addr %s151, 8
      %s153 = scalar_lea.vmem %s1, %s152
      %p154 = pneg %p72
      %p155 = pneg %p69
      %p156 = pneg %p100
      %p157 = pneg %p97
      %s158 = smul.u32 8, %s18
      %p159 = scmp.lt.s32.totalorder %s17, 0
      %s160 = scalar_select %p159, %s17, 0
      %p161 = scmp.lt.s32.totalorder %s158, 15
      %s162 = scalar_select %p161, %s158, 15
      %s163 = smul.addr %s162, 2
      %s164 = smul.addr %s160, 32
      %s165 = sadd.s32 %s163, %s164
      %s166 = smul.addr %s165, 8
      %s167 = scalar_lea.vmem %s2, %s166
      %p168 = scmp.lt.s32.totalorder %s17, 0
      %s169 = scalar_select %p168, %s17, 0
      %s170 = smul.addr %s169, 30
      %s171 = smul.addr %s170, 8
      %s172 = scalar_lea.vmem %s0, %s171
      %p173 = scmp.lt.s32.totalorder %s17, 0
      %s174 = scalar_select %p173, %s17, 0
      %s175 = smul.addr %s174, 120
      %s176 = smul.addr %s175, 8
      %s177 = scalar_lea.vmem %s1, %s176
      %s178 = smul.u32 8, %s18
      %p179 = scmp.lt.s32.totalorder %s17, 0
      %s180 = scalar_select %p179, %s17, 0
      %p181 = scmp.lt.s32.totalorder %s178, 15
      %s182 = scalar_select %p181, %s178, 15
      %s183 = smul.addr %s182, 2
      %s184 = smul.addr %s180, 32
      %s185 = sadd.s32 %s183, %s184
      %s186 = smul.addr %s185, 8
      %s187 = scalar_lea.vmem %s2, %s186
      %s188 = smul.u32 8, %s18
      %s189 = smul.u32 %s18, 8
      %v190 = vld [vmem:[%s172] sm:$0xff]
      %v191 = vld [vmem:[%s172 + $0x8] sm:$0x7f]
      %s192 = smul.u32 %s189, 32
      %s193 = scalar_lea.vmem %s177, %s192
      %v194 = vld [vmem:[%s193] sm:$0xff]
      %v195 = vld [vmem:[%s193 + $0x8] sm:$0xff]
      %v196 = vld [vmem:[%s193 + $0x20] sm:$0xff]
      %v197 = vld [vmem:[%s193 + $0x28] sm:$0xff]
      %v198 = vld [vmem:[%s193 + $0x40] sm:$0xff]
      %v199 = vld [vmem:[%s193 + $0x48] sm:$0xff]
      %v200 = vld [vmem:[%s193 + $0x60] sm:$0xff]
      %v201 = vld [vmem:[%s193 + $0x68] sm:$0xff]
      %v202 = vld [vmem:[%s193 + $0x80] sm:$0xff]
      %v203 = vld [vmem:[%s193 + $0x88] sm:$0xff]
      %v204 = vld [vmem:[%s193 + $0xa0] sm:$0xff]
      %v205 = vld [vmem:[%s193 + $0xa8] sm:$0xff]
      %v206 = vld [vmem:[%s193 + $0xc0] sm:$0xff]
      %v207 = vld [vmem:[%s193 + $0xc8] sm:$0xff]
      %v208 = vld [vmem:[%s193 + $0xe0] sm:$0xff]
      %v209 = vld [vmem:[%s193 + $0xe8] sm:$0xff]
      %v210 = vlaneseq
      %v211 = vshrl.u32 %v210, 7
      %v212 = vsub.s32 0, %v211
      %v213 = vrot.slane %v190, %v212
      %v214 = vmul.f32 %v194, %v213
      %v215 = vmul.f32 %v195, %v213
      %v216 = vmul.f32 %v196, %v213
      %v217 = vmul.f32 %v197, %v213
      %v218 = vmul.f32 %v198, %v213
      %v219 = vmul.f32 %v199, %v213
      %v220 = vmul.f32 %v200, %v213
      %v221 = vmul.f32 %v201, %v213
      %v222 = vmul.f32 %v202, %v213
      %v223 = vmul.f32 %v203, %v213
      %v224 = vmul.f32 %v204, %v213
      %v225 = vmul.f32 %v205, %v213
      %v226 = vmul.f32 %v206, %v213
      %v227 = vmul.f32 %v207, %v213
      %v228 = vmul.f32 %v208, %v213
      %v229 = vmul.f32 %v209, %v213
      %v230 = vld [vmem:[%s193 + $0x1] sm:$0xff]
      %v231 = vld [vmem:[%s193 + $0x9] sm:$0xff]
      %v232 = vld [vmem:[%s193 + $0x21] sm:$0xff]
      %v233 = vld [vmem:[%s193 + $0x29] sm:$0xff]
      %v234 = vld [vmem:[%s193 + $0x41] sm:$0xff]
      %v235 = vld [vmem:[%s193 + $0x49] sm:$0xff]
      %v236 = vld [vmem:[%s193 + $0x61] sm:$0xff]
      %v237 = vld [vmem:[%s193 + $0x69] sm:$0xff]
      %v238 = vld [vmem:[%s193 + $0x81] sm:$0xff]
      %v239 = vld [vmem:[%s193 + $0x89] sm:$0xff]
      %v240 = vld [vmem:[%s193 + $0xa1] sm:$0xff]
      %v241 = vld [vmem:[%s193 + $0xa9] sm:$0xff]
      %v242 = vld [vmem:[%s193 + $0xc1] sm:$0xff]
      %v243 = vld [vmem:[%s193 + $0xc9] sm:$0xff]
      %v244 = vld [vmem:[%s193 + $0xe1] sm:$0xff]
      %v245 = vld [vmem:[%s193 + $0xe9] sm:$0xff]
      %v246 = vlaneseq
      %v247 = vshrl.u32 %v246, 7
      %v248 = vsub.s32 1, %v247
      %v249 = vrot.slane %v190, %v248
      %v250 = vmul.f32 %v230, %v249
      %v251 = vmul.f32 %v231, %v249
      %v252 = vmul.f32 %v232, %v249
      %v253 = vmul.f32 %v233, %v249
      %v254 = vmul.f32 %v234, %v249
      %v255 = vmul.f32 %v235, %v249
      %v256 = vmul.f32 %v236, %v249
      %v257 = vmul.f32 %v237, %v249
      %v258 = vmul.f32 %v238, %v249
      %v259 = vmul.f32 %v239, %v249
      %v260 = vmul.f32 %v240, %v249
      %v261 = vmul.f32 %v241, %v249
      %v262 = vmul.f32 %v242, %v249
      %v263 = vmul.f32 %v243, %v249
      %v264 = vmul.f32 %v244, %v249
      %v265 = vmul.f32 %v245, %v249
      %v266 = vadd.f32 %v214, %v250
      %v267 = vadd.f32 %v215, %v251
      %v268 = vadd.f32 %v216, %v252
      %v269 = vadd.f32 %v217, %v253
      %v270 = vadd.f32 %v218, %v254
      %v271 = vadd.f32 %v219, %v255
      %v272 = vadd.f32 %v220, %v256
      %v273 = vadd.f32 %v221, %v257
      %v274 = vadd.f32 %v222, %v258
      %v275 = vadd.f32 %v223, %v259
      %v276 = vadd.f32 %v224, %v260
      %v277 = vadd.f32 %v225, %v261
      %v278 = vadd.f32 %v226, %v262
      %v279 = vadd.f32 %v227, %v263
      %v280 = vadd.f32 %v228, %v264
      %v281 = vadd.f32 %v229, %v265
      %v282 = vld [vmem:[%s193 + $0x2] sm:$0xff]
      %v283 = vld [vmem:[%s193 + $0xa] sm:$0xff]
      %v284 = vld [vmem:[%s193 + $0x22] sm:$0xff]
      %v285 = vld [vmem:[%s193 + $0x2a] sm:$0xff]
      %v286 = vld [vmem:[%s193 + $0x42] sm:$0xff]
      %v287 = vld [vmem:[%s193 + $0x4a] sm:$0xff]
      %v288 = vld [vmem:[%s193 + $0x62] sm:$0xff]
      %v289 = vld [vmem:[%s193 + $0x6a] sm:$0xff]
      %v290 = vld [vmem:[%s193 + $0x82] sm:$0xff]
      %v291 = vld [vmem:[%s193 + $0x8a] sm:$0xff]
      %v292 = vld [vmem:[%s193 + $0xa2] sm:$0xff]
      %v293 = vld [vmem:[%s193 + $0xaa] sm:$0xff]
      %v294 = vld [vmem:[%s193 + $0xc2] sm:$0xff]
      %v295 = vld [vmem:[%s193 + $0xca] sm:$0xff]
      %v296 = vld [vmem:[%s193 + $0xe2] sm:$0xff]
      %v297 = vld [vmem:[%s193 + $0xea] sm:$0xff]
      %v298 = vlaneseq
      %v299 = vshrl.u32 %v298, 7
      %v300 = vsub.s32 2, %v299
      %v301 = vrot.slane %v190, %v300
      %v302 = vmul.f32 %v282, %v301
      %v303 = vmul.f32 %v283, %v301
      %v304 = vmul.f32 %v284, %v301
      %v305 = vmul.f32 %v285, %v301
      %v306 = vmul.f32 %v286, %v301
      %v307 = vmul.f32 %v287, %v301
      %v308 = vmul.f32 %v288, %v301
      %v309 = vmul.f32 %v289, %v301
      %v310 = vmul.f32 %v290, %v301
      %v311 = vmul.f32 %v291, %v301
      %v312 = vmul.f32 %v292, %v301
      %v313 = vmul.f32 %v293, %v301
      %v314 = vmul.f32 %v294, %v301
      %v315 = vmul.f32 %v295, %v301
      %v316 = vmul.f32 %v296, %v301
      %v317 = vmul.f32 %v297, %v301
      %v318 = vadd.f32 %v266, %v302
      %v319 = vadd.f32 %v267, %v303
      %v320 = vadd.f32 %v268, %v304
      %v321 = vadd.f32 %v269, %v305
      %v322 = vadd.f32 %v270, %v306
      %v323 = vadd.f32 %v271, %v307
      %v324 = vadd.f32 %v272, %v308
      %v325 = vadd.f32 %v273, %v309
      %v326 = vadd.f32 %v274, %v310
      %v327 = vadd.f32 %v275, %v311
      %v328 = vadd.f32 %v276, %v312
      %v329 = vadd.f32 %v277, %v313
      %v330 = vadd.f32 %v278, %v314
      %v331 = vadd.f32 %v279, %v315
      %v332 = vadd.f32 %v280, %v316
      %v333 = vadd.f32 %v281, %v317
      %v334 = vld [vmem:[%s193 + $0x3] sm:$0xff]
      %v335 = vld [vmem:[%s193 + $0xb] sm:$0xff]
      %v336 = vld [vmem:[%s193 + $0x23] sm:$0xff]
      %v337 = vld [vmem:[%s193 + $0x2b] sm:$0xff]
      %v338 = vld [vmem:[%s193 + $0x43] sm:$0xff]
      %v339 = vld [vmem:[%s193 + $0x4b] sm:$0xff]
      %v340 = vld [vmem:[%s193 + $0x63] sm:$0xff]
      %v341 = vld [vmem:[%s193 + $0x6b] sm:$0xff]
      %v342 = vld [vmem:[%s193 + $0x83] sm:$0xff]
      %v343 = vld [vmem:[%s193 + $0x8b] sm:$0xff]
      %v344 = vld [vmem:[%s193 + $0xa3] sm:$0xff]
      %v345 = vld [vmem:[%s193 + $0xab] sm:$0xff]
      %v346 = vld [vmem:[%s193 + $0xc3] sm:$0xff]
      %v347 = vld [vmem:[%s193 + $0xcb] sm:$0xff]
      %v348 = vld [vmem:[%s193 + $0xe3] sm:$0xff]
      %v349 = vld [vmem:[%s193 + $0xeb] sm:$0xff]
      %v350 = vlaneseq
      %v351 = vshrl.u32 %v350, 7
      %v352 = vsub.s32 3, %v351
      %v353 = vrot.slane %v190, %v352
      %v354 = vmul.f32 %v334, %v353
      %v355 = vmul.f32 %v335, %v353
      %v356 = vmul.f32 %v336, %v353
      %v357 = vmul.f32 %v337, %v353
      %v358 = vmul.f32 %v338, %v353
      %v359 = vmul.f32 %v339, %v353
      %v360 = vmul.f32 %v340, %v353
      %v361 = vmul.f32 %v341, %v353
      %v362 = vmul.f32 %v342, %v353
      %v363 = vmul.f32 %v343, %v353
      %v364 = vmul.f32 %v344, %v353
      %v365 = vmul.f32 %v345, %v353
      %v366 = vmul.f32 %v346, %v353
      %v367 = vmul.f32 %v347, %v353
      %v368 = vmul.f32 %v348, %v353
      %v369 = vmul.f32 %v349, %v353
      %v370 = vadd.f32 %v318, %v354
      %v371 = vadd.f32 %v319, %v355
      %v372 = vadd.f32 %v320, %v356
      %v373 = vadd.f32 %v321, %v357
      %v374 = vadd.f32 %v322, %v358
      %v375 = vadd.f32 %v323, %v359
      %v376 = vadd.f32 %v324, %v360
      %v377 = vadd.f32 %v325, %v361
      %v378 = vadd.f32 %v326, %v362
      %v379 = vadd.f32 %v327, %v363
      %v380 = vadd.f32 %v328, %v364
      %v381 = vadd.f32 %v329, %v365
      %v382 = vadd.f32 %v330, %v366
      %v383 = vadd.f32 %v331, %v367
      %v384 = vadd.f32 %v332, %v368
      %v385 = vadd.f32 %v333, %v369
      %v386 = vld [vmem:[%s193 + $0x4] sm:$0xff]
      %v387 = vld [vmem:[%s193 + $0xc] sm:$0xff]
      %v388 = vld [vmem:[%s193 + $0x24] sm:$0xff]
      %v389 = vld [vmem:[%s193 + $0x2c] sm:$0xff]
      %v390 = vld [vmem:[%s193 + $0x44] sm:$0xff]
      %v391 = vld [vmem:[%s193 + $0x4c] sm:$0xff]
      %v392 = vld [vmem:[%s193 + $0x64] sm:$0xff]
      %v393 = vld [vmem:[%s193 + $0x6c] sm:$0xff]
      %v394 = vld [vmem:[%s193 + $0x84] sm:$0xff]
      %v395 = vld [vmem:[%s193 + $0x8c] sm:$0xff]
      %v396 = vld [vmem:[%s193 + $0xa4] sm:$0xff]
      %v397 = vld [vmem:[%s193 + $0xac] sm:$0xff]
      %v398 = vld [vmem:[%s193 + $0xc4] sm:$0xff]
      %v399 = vld [vmem:[%s193 + $0xcc] sm:$0xff]
      %v400 = vld [vmem:[%s193 + $0xe4] sm:$0xff]
      %v401 = vld [vmem:[%s193 + $0xec] sm:$0xff]
      %v402 = vlaneseq
      %v403 = vshrl.u32 %v402, 7
      %v404 = vsub.s32 4, %v403
      %v405 = vrot.slane %v190, %v404
      %v406 = vmul.f32 %v386, %v405
      %v407 = vmul.f32 %v387, %v405
      %v408 = vmul.f32 %v388, %v405
      %v409 = vmul.f32 %v389, %v405
      %v410 = vmul.f32 %v390, %v405
      %v411 = vmul.f32 %v391, %v405
      %v412 = vmul.f32 %v392, %v405
      %v413 = vmul.f32 %v393, %v405
      %v414 = vmul.f32 %v394, %v405
      %v415 = vmul.f32 %v395, %v405
      %v416 = vmul.f32 %v396, %v405
      %v417 = vmul.f32 %v397, %v405
      %v418 = vmul.f32 %v398, %v405
      %v419 = vmul.f32 %v399, %v405
      %v420 = vmul.f32 %v400, %v405
      %v421 = vmul.f32 %v401, %v405
      %v422 = vadd.f32 %v370, %v406
      %v423 = vadd.f32 %v371, %v407
      %v424 = vadd.f32 %v372, %v408
      %v425 = vadd.f32 %v373, %v409
      %v426 = vadd.f32 %v374, %v410
      %v427 = vadd.f32 %v375, %v411
      %v428 = vadd.f32 %v376, %v412
      %v429 = vadd.f32 %v377, %v413
      %v430 = vadd.f32 %v378, %v414
      %v431 = vadd.f32 %v379, %v415
      %v432 = vadd.f32 %v380, %v416
      %v433 = vadd.f32 %v381, %v417
      %v434 = vadd.f32 %v382, %v418
      %v435 = vadd.f32 %v383, %v419
      %v436 = vadd.f32 %v384, %v420
      %v437 = vadd.f32 %v385, %v421
      %v438 = vld [vmem:[%s193 + $0x5] sm:$0xff]
      %v439 = vld [vmem:[%s193 + $0xd] sm:$0xff]
      %v440 = vld [vmem:[%s193 + $0x25] sm:$0xff]
      %v441 = vld [vmem:[%s193 + $0x2d] sm:$0xff]
      %v442 = vld [vmem:[%s193 + $0x45] sm:$0xff]
      %v443 = vld [vmem:[%s193 + $0x4d] sm:$0xff]
      %v444 = vld [vmem:[%s193 + $0x65] sm:$0xff]
      %v445 = vld [vmem:[%s193 + $0x6d] sm:$0xff]
      %v446 = vld [vmem:[%s193 + $0x85] sm:$0xff]
      %v447 = vld [vmem:[%s193 + $0x8d] sm:$0xff]
      %v448 = vld [vmem:[%s193 + $0xa5] sm:$0xff]
      %v449 = vld [vmem:[%s193 + $0xad] sm:$0xff]
      %v450 = vld [vmem:[%s193 + $0xc5] sm:$0xff]
      %v451 = vld [vmem:[%s193 + $0xcd] sm:$0xff]
      %v452 = vld [vmem:[%s193 + $0xe5] sm:$0xff]
      %v453 = vld [vmem:[%s193 + $0xed] sm:$0xff]
      %v454 = vlaneseq
      %v455 = vshrl.u32 %v454, 7
      %v456 = vsub.s32 5, %v455
      %v457 = vrot.slane %v190, %v456
      %v458 = vmul.f32 %v438, %v457
      %v459 = vmul.f32 %v439, %v457
      %v460 = vmul.f32 %v440, %v457
      %v461 = vmul.f32 %v441, %v457
      %v462 = vmul.f32 %v442, %v457
      %v463 = vmul.f32 %v443, %v457
      %v464 = vmul.f32 %v444, %v457
      %v465 = vmul.f32 %v445, %v457
      %v466 = vmul.f32 %v446, %v457
      %v467 = vmul.f32 %v447, %v457
      %v468 = vmul.f32 %v448, %v457
      %v469 = vmul.f32 %v449, %v457
      %v470 = vmul.f32 %v450, %v457
      %v471 = vmul.f32 %v451, %v457
      %v472 = vmul.f32 %v452, %v457
      %v473 = vmul.f32 %v453, %v457
      %v474 = vadd.f32 %v422, %v458
      %v475 = vadd.f32 %v423, %v459
      %v476 = vadd.f32 %v424, %v460
      %v477 = vadd.f32 %v425, %v461
      %v478 = vadd.f32 %v426, %v462
      %v479 = vadd.f32 %v427, %v463
      %v480 = vadd.f32 %v428, %v464
      %v481 = vadd.f32 %v429, %v465
      %v482 = vadd.f32 %v430, %v466
      %v483 = vadd.f32 %v431, %v467
      %v484 = vadd.f32 %v432, %v468
      %v485 = vadd.f32 %v433, %v469
      %v486 = vadd.f32 %v434, %v470
      %v487 = vadd.f32 %v435, %v471
      %v488 = vadd.f32 %v436, %v472
      %v489 = vadd.f32 %v437, %v473
      %v490 = vld [vmem:[%s193 + $0x6] sm:$0xff]
      %v491 = vld [vmem:[%s193 + $0xe] sm:$0xff]
      %v492 = vld [vmem:[%s193 + $0x26] sm:$0xff]
      %v493 = vld [vmem:[%s193 + $0x2e] sm:$0xff]
      %v494 = vld [vmem:[%s193 + $0x46] sm:$0xff]
      %v495 = vld [vmem:[%s193 + $0x4e] sm:$0xff]
      %v496 = vld [vmem:[%s193 + $0x66] sm:$0xff]
      %v497 = vld [vmem:[%s193 + $0x6e] sm:$0xff]
      %v498 = vld [vmem:[%s193 + $0x86] sm:$0xff]
      %v499 = vld [vmem:[%s193 + $0x8e] sm:$0xff]
      %v500 = vld [vmem:[%s193 + $0xa6] sm:$0xff]
      %v501 = vld [vmem:[%s193 + $0xae] sm:$0xff]
      %v502 = vld [vmem:[%s193 + $0xc6] sm:$0xff]
      %v503 = vld [vmem:[%s193 + $0xce] sm:$0xff]
      %v504 = vld [vmem:[%s193 + $0xe6] sm:$0xff]
      %v505 = vld [vmem:[%s193 + $0xee] sm:$0xff]
      %v506 = vlaneseq
      %v507 = vshrl.u32 %v506, 7
      %v508 = vsub.s32 6, %v507
      %v509 = vrot.slane %v190, %v508
      %v510 = vmul.f32 %v490, %v509
      %v511 = vmul.f32 %v491, %v509
      %v512 = vmul.f32 %v492, %v509
      %v513 = vmul.f32 %v493, %v509
      %v514 = vmul.f32 %v494, %v509
      %v515 = vmul.f32 %v495, %v509
      %v516 = vmul.f32 %v496, %v509
      %v517 = vmul.f32 %v497, %v509
      %v518 = vmul.f32 %v498, %v509
      %v519 = vmul.f32 %v499, %v509
      %v520 = vmul.f32 %v500, %v509
      %v521 = vmul.f32 %v501, %v509
      %v522 = vmul.f32 %v502, %v509
      %v523 = vmul.f32 %v503, %v509
      %v524 = vmul.f32 %v504, %v509
      %v525 = vmul.f32 %v505, %v509
      %v526 = vadd.f32 %v474, %v510
      %v527 = vadd.f32 %v475, %v511
      %v528 = vadd.f32 %v476, %v512
      %v529 = vadd.f32 %v477, %v513
      %v530 = vadd.f32 %v478, %v514
      %v531 = vadd.f32 %v479, %v515
      %v532 = vadd.f32 %v480, %v516
      %v533 = vadd.f32 %v481, %v517
      %v534 = vadd.f32 %v482, %v518
      %v535 = vadd.f32 %v483, %v519
      %v536 = vadd.f32 %v484, %v520
      %v537 = vadd.f32 %v485, %v521
      %v538 = vadd.f32 %v486, %v522
      %v539 = vadd.f32 %v487, %v523
      %v540 = vadd.f32 %v488, %v524
      %v541 = vadd.f32 %v489, %v525
      %v542 = vld [vmem:[%s193 + $0x7] sm:$0xff]
      %v543 = vld [vmem:[%s193 + $0xf] sm:$0xff]
      %v544 = vld [vmem:[%s193 + $0x27] sm:$0xff]
      %v545 = vld [vmem:[%s193 + $0x2f] sm:$0xff]
      %v546 = vld [vmem:[%s193 + $0x47] sm:$0xff]
      %v547 = vld [vmem:[%s193 + $0x4f] sm:$0xff]
      %v548 = vld [vmem:[%s193 + $0x67] sm:$0xff]
      %v549 = vld [vmem:[%s193 + $0x6f] sm:$0xff]
      %v550 = vld [vmem:[%s193 + $0x87] sm:$0xff]
      %v551 = vld [vmem:[%s193 + $0x8f] sm:$0xff]
      %v552 = vld [vmem:[%s193 + $0xa7] sm:$0xff]
      %v553 = vld [vmem:[%s193 + $0xaf] sm:$0xff]
      %v554 = vld [vmem:[%s193 + $0xc7] sm:$0xff]
      %v555 = vld [vmem:[%s193 + $0xcf] sm:$0xff]
      %v556 = vld [vmem:[%s193 + $0xe7] sm:$0xff]
      %v557 = vld [vmem:[%s193 + $0xef] sm:$0xff]
      %v558 = vlaneseq
      %v559 = vshrl.u32 %v558, 7
      %v560 = vsub.s32 7, %v559
      %v561 = vrot.slane %v190, %v560
      %v562 = vmul.f32 %v542, %v561
      %v563 = vmul.f32 %v543, %v561
      %v564 = vmul.f32 %v544, %v561
      %v565 = vmul.f32 %v545, %v561
      %v566 = vmul.f32 %v546, %v561
      %v567 = vmul.f32 %v547, %v561
      %v568 = vmul.f32 %v548, %v561
      %v569 = vmul.f32 %v549, %v561
      %v570 = vmul.f32 %v550, %v561
      %v571 = vmul.f32 %v551, %v561
      %v572 = vmul.f32 %v552, %v561
      %v573 = vmul.f32 %v553, %v561
      %v574 = vmul.f32 %v554, %v561
      %v575 = vmul.f32 %v555, %v561
      %v576 = vmul.f32 %v556, %v561
      %v577 = vmul.f32 %v557, %v561
      %v578 = vadd.f32 %v526, %v562
      %v579 = vadd.f32 %v527, %v563
      %v580 = vadd.f32 %v528, %v564
      %v581 = vadd.f32 %v529, %v565
      %v582 = vadd.f32 %v530, %v566
      %v583 = vadd.f32 %v531, %v567
      %v584 = vadd.f32 %v532, %v568
      %v585 = vadd.f32 %v533, %v569
      %v586 = vadd.f32 %v534, %v570
      %v587 = vadd.f32 %v535, %v571
      %v588 = vadd.f32 %v536, %v572
      %v589 = vadd.f32 %v537, %v573
      %v590 = vadd.f32 %v538, %v574
      %v591 = vadd.f32 %v539, %v575
      %v592 = vadd.f32 %v540, %v576
      %v593 = vadd.f32 %v541, %v577
      %v594 = vld [vmem:[%s193 + $0x10] sm:$0xff]
      %v595 = vld [vmem:[%s193 + $0x30] sm:$0xff]
      %v596 = vld [vmem:[%s193 + $0x50] sm:$0xff]
      %v597 = vld [vmem:[%s193 + $0x70] sm:$0xff]
      %v598 = vld [vmem:[%s193 + $0x90] sm:$0xff]
      %v599 = vld [vmem:[%s193 + $0xb0] sm:$0xff]
      %v600 = vld [vmem:[%s193 + $0xd0] sm:$0xff]
      %v601 = vld [vmem:[%s193 + $0xf0] sm:$0xff]
      %v602 = vlaneseq
      %v603 = vshrl.u32 %v602, 7
      %v604 = vsub.s32 0, %v603
      %v605 = vrot.slane %v191, %v604
      %v606 = vmul.f32 %v195, %v605
      %v607 = vmul.f32 %v594, %v605
      %v608 = vmul.f32 %v197, %v605
      %v609 = vmul.f32 %v595, %v605
      %v610 = vmul.f32 %v199, %v605
      %v611 = vmul.f32 %v596, %v605
      %v612 = vmul.f32 %v201, %v605
      %v613 = vmul.f32 %v597, %v605
      %v614 = vmul.f32 %v203, %v605
      %v615 = vmul.f32 %v598, %v605
      %v616 = vmul.f32 %v205, %v605
      %v617 = vmul.f32 %v599, %v605
      %v618 = vmul.f32 %v207, %v605
      %v619 = vmul.f32 %v600, %v605
      %v620 = vmul.f32 %v209, %v605
      %v621 = vmul.f32 %v601, %v605
      %v622 = vadd.f32 %v578, %v606
      %v623 = vadd.f32 %v579, %v607
      %v624 = vadd.f32 %v580, %v608
      %v625 = vadd.f32 %v581, %v609
      %v626 = vadd.f32 %v582, %v610
      %v627 = vadd.f32 %v583, %v611
      %v628 = vadd.f32 %v584, %v612
      %v629 = vadd.f32 %v585, %v613
      %v630 = vadd.f32 %v586, %v614
      %v631 = vadd.f32 %v587, %v615
      %v632 = vadd.f32 %v588, %v616
      %v633 = vadd.f32 %v589, %v617
      %v634 = vadd.f32 %v590, %v618
      %v635 = vadd.f32 %v591, %v619
      %v636 = vadd.f32 %v592, %v620
      %v637 = vadd.f32 %v593, %v621
      %v638 = vld [vmem:[%s193 + $0x11] sm:$0xff]
      %v639 = vld [vmem:[%s193 + $0x31] sm:$0xff]
      %v640 = vld [vmem:[%s193 + $0x51] sm:$0xff]
      %v641 = vld [vmem:[%s193 + $0x71] sm:$0xff]
      %v642 = vld [vmem:[%s193 + $0x91] sm:$0xff]
      %v643 = vld [vmem:[%s193 + $0xb1] sm:$0xff]
      %v644 = vld [vmem:[%s193 + $0xd1] sm:$0xff]
      %v645 = vld [vmem:[%s193 + $0xf1] sm:$0xff]
      %v646 = vlaneseq
      %v647 = vshrl.u32 %v646, 7
      %v648 = vsub.s32 1, %v647
      %v649 = vrot.slane %v191, %v648
      %v650 = vmul.f32 %v231, %v649
      %v651 = vmul.f32 %v638, %v649
      %v652 = vmul.f32 %v233, %v649
      %v653 = vmul.f32 %v639, %v649
      %v654 = vmul.f32 %v235, %v649
      %v655 = vmul.f32 %v640, %v649
      %v656 = vmul.f32 %v237, %v649
      %v657 = vmul.f32 %v641, %v649
      %v658 = vmul.f32 %v239, %v649
      %v659 = vmul.f32 %v642, %v649
      %v660 = vmul.f32 %v241, %v649
      %v661 = vmul.f32 %v643, %v649
      %v662 = vmul.f32 %v243, %v649
      %v663 = vmul.f32 %v644, %v649
      %v664 = vmul.f32 %v245, %v649
      %v665 = vmul.f32 %v645, %v649
      %v666 = vadd.f32 %v622, %v650
      %v667 = vadd.f32 %v623, %v651
      %v668 = vadd.f32 %v624, %v652
      %v669 = vadd.f32 %v625, %v653
      %v670 = vadd.f32 %v626, %v654
      %v671 = vadd.f32 %v627, %v655
      %v672 = vadd.f32 %v628, %v656
      %v673 = vadd.f32 %v629, %v657
      %v674 = vadd.f32 %v630, %v658
      %v675 = vadd.f32 %v631, %v659
      %v676 = vadd.f32 %v632, %v660
      %v677 = vadd.f32 %v633, %v661
      %v678 = vadd.f32 %v634, %v662
      %v679 = vadd.f32 %v635, %v663
      %v680 = vadd.f32 %v636, %v664
      %v681 = vadd.f32 %v637, %v665
      %v682 = vld [vmem:[%s193 + $0x12] sm:$0xff]
      %v683 = vld [vmem:[%s193 + $0x32] sm:$0xff]
      %v684 = vld [vmem:[%s193 + $0x52] sm:$0xff]
      %v685 = vld [vmem:[%s193 + $0x72] sm:$0xff]
      %v686 = vld [vmem:[%s193 + $0x92] sm:$0xff]
      %v687 = vld [vmem:[%s193 + $0xb2] sm:$0xff]
      %v688 = vld [vmem:[%s193 + $0xd2] sm:$0xff]
      %v689 = vld [vmem:[%s193 + $0xf2] sm:$0xff]
      %v690 = vlaneseq
      %v691 = vshrl.u32 %v690, 7
      %v692 = vsub.s32 2, %v691
      %v693 = vrot.slane %v191, %v692
      %v694 = vmul.f32 %v283, %v693
      %v695 = vmul.f32 %v682, %v693
      %v696 = vmul.f32 %v285, %v693
      %v697 = vmul.f32 %v683, %v693
      %v698 = vmul.f32 %v287, %v693
      %v699 = vmul.f32 %v684, %v693
      %v700 = vmul.f32 %v289, %v693
      %v701 = vmul.f32 %v685, %v693
      %v702 = vmul.f32 %v291, %v693
      %v703 = vmul.f32 %v686, %v693
      %v704 = vmul.f32 %v293, %v693
      %v705 = vmul.f32 %v687, %v693
      %v706 = vmul.f32 %v295, %v693
      %v707 = vmul.f32 %v688, %v693
      %v708 = vmul.f32 %v297, %v693
      %v709 = vmul.f32 %v689, %v693
      %v710 = vadd.f32 %v666, %v694
      %v711 = vadd.f32 %v667, %v695
      %v712 = vadd.f32 %v668, %v696
      %v713 = vadd.f32 %v669, %v697
      %v714 = vadd.f32 %v670, %v698
      %v715 = vadd.f32 %v671, %v699
      %v716 = vadd.f32 %v672, %v700
      %v717 = vadd.f32 %v673, %v701
      %v718 = vadd.f32 %v674, %v702
      %v719 = vadd.f32 %v675, %v703
      %v720 = vadd.f32 %v676, %v704
      %v721 = vadd.f32 %v677, %v705
      %v722 = vadd.f32 %v678, %v706
      %v723 = vadd.f32 %v679, %v707
      %v724 = vadd.f32 %v680, %v708
      %v725 = vadd.f32 %v681, %v709
      %v726 = vld [vmem:[%s193 + $0x13] sm:$0xff]
      %v727 = vld [vmem:[%s193 + $0x33] sm:$0xff]
      %v728 = vld [vmem:[%s193 + $0x53] sm:$0xff]
      %v729 = vld [vmem:[%s193 + $0x73] sm:$0xff]
      %v730 = vld [vmem:[%s193 + $0x93] sm:$0xff]
      %v731 = vld [vmem:[%s193 + $0xb3] sm:$0xff]
      %v732 = vld [vmem:[%s193 + $0xd3] sm:$0xff]
      %v733 = vld [vmem:[%s193 + $0xf3] sm:$0xff]
      %v734 = vlaneseq
      %v735 = vshrl.u32 %v734, 7
      %v736 = vsub.s32 3, %v735
      %v737 = vrot.slane %v191, %v736
      %v738 = vmul.f32 %v335, %v737
      %v739 = vmul.f32 %v726, %v737
      %v740 = vmul.f32 %v337, %v737
      %v741 = vmul.f32 %v727, %v737
      %v742 = vmul.f32 %v339, %v737
      %v743 = vmul.f32 %v728, %v737
      %v744 = vmul.f32 %v341, %v737
      %v745 = vmul.f32 %v729, %v737
      %v746 = vmul.f32 %v343, %v737
      %v747 = vmul.f32 %v730, %v737
      %v748 = vmul.f32 %v345, %v737
      %v749 = vmul.f32 %v731, %v737
      %v750 = vmul.f32 %v347, %v737
      %v751 = vmul.f32 %v732, %v737
      %v752 = vmul.f32 %v349, %v737
      %v753 = vmul.f32 %v733, %v737
      %v754 = vadd.f32 %v710, %v738
      %v755 = vadd.f32 %v711, %v739
      %v756 = vadd.f32 %v712, %v740
      %v757 = vadd.f32 %v713, %v741
      %v758 = vadd.f32 %v714, %v742
      %v759 = vadd.f32 %v715, %v743
      %v760 = vadd.f32 %v716, %v744
      %v761 = vadd.f32 %v717, %v745
      %v762 = vadd.f32 %v718, %v746
      %v763 = vadd.f32 %v719, %v747
      %v764 = vadd.f32 %v720, %v748
      %v765 = vadd.f32 %v721, %v749
      %v766 = vadd.f32 %v722, %v750
      %v767 = vadd.f32 %v723, %v751
      %v768 = vadd.f32 %v724, %v752
      %v769 = vadd.f32 %v725, %v753
      %v770 = vld [vmem:[%s193 + $0x14] sm:$0xff]
      %v771 = vld [vmem:[%s193 + $0x34] sm:$0xff]
      %v772 = vld [vmem:[%s193 + $0x54] sm:$0xff]
      %v773 = vld [vmem:[%s193 + $0x74] sm:$0xff]
      %v774 = vld [vmem:[%s193 + $0x94] sm:$0xff]
      %v775 = vld [vmem:[%s193 + $0xb4] sm:$0xff]
      %v776 = vld [vmem:[%s193 + $0xd4] sm:$0xff]
      %v777 = vld [vmem:[%s193 + $0xf4] sm:$0xff]
      %v778 = vlaneseq
      %v779 = vshrl.u32 %v778, 7
      %v780 = vsub.s32 4, %v779
      %v781 = vrot.slane %v191, %v780
      %v782 = vmul.f32 %v387, %v781
      %v783 = vmul.f32 %v770, %v781
      %v784 = vmul.f32 %v389, %v781
      %v785 = vmul.f32 %v771, %v781
      %v786 = vmul.f32 %v391, %v781
      %v787 = vmul.f32 %v772, %v781
      %v788 = vmul.f32 %v393, %v781
      %v789 = vmul.f32 %v773, %v781
      %v790 = vmul.f32 %v395, %v781
      %v791 = vmul.f32 %v774, %v781
      %v792 = vmul.f32 %v397, %v781
      %v793 = vmul.f32 %v775, %v781
      %v794 = vmul.f32 %v399, %v781
      %v795 = vmul.f32 %v776, %v781
      %v796 = vmul.f32 %v401, %v781
      %v797 = vmul.f32 %v777, %v781
      %v798 = vadd.f32 %v754, %v782
      %v799 = vadd.f32 %v755, %v783
      %v800 = vadd.f32 %v756, %v784
      %v801 = vadd.f32 %v757, %v785
      %v802 = vadd.f32 %v758, %v786
      %v803 = vadd.f32 %v759, %v787
      %v804 = vadd.f32 %v760, %v788
      %v805 = vadd.f32 %v761, %v789
      %v806 = vadd.f32 %v762, %v790
      %v807 = vadd.f32 %v763, %v791
      %v808 = vadd.f32 %v764, %v792
      %v809 = vadd.f32 %v765, %v793
      %v810 = vadd.f32 %v766, %v794
      %v811 = vadd.f32 %v767, %v795
      %v812 = vadd.f32 %v768, %v796
      %v813 = vadd.f32 %v769, %v797
      %v814 = vld [vmem:[%s193 + $0x15] sm:$0xff]
      %v815 = vld [vmem:[%s193 + $0x35] sm:$0xff]
      %v816 = vld [vmem:[%s193 + $0x55] sm:$0xff]
      %v817 = vld [vmem:[%s193 + $0x75] sm:$0xff]
      %v818 = vld [vmem:[%s193 + $0x95] sm:$0xff]
      %v819 = vld [vmem:[%s193 + $0xb5] sm:$0xff]
      %v820 = vld [vmem:[%s193 + $0xd5] sm:$0xff]
      %v821 = vld [vmem:[%s193 + $0xf5] sm:$0xff]
      %v822 = vlaneseq
      %v823 = vshrl.u32 %v822, 7
      %v824 = vsub.s32 5, %v823
      %v825 = vrot.slane %v191, %v824
      %v826 = vmul.f32 %v439, %v825
      %v827 = vmul.f32 %v814, %v825
      %v828 = vmul.f32 %v441, %v825
      %v829 = vmul.f32 %v815, %v825
      %v830 = vmul.f32 %v443, %v825
      %v831 = vmul.f32 %v816, %v825
      %v832 = vmul.f32 %v445, %v825
      %v833 = vmul.f32 %v817, %v825
      %v834 = vmul.f32 %v447, %v825
      %v835 = vmul.f32 %v818, %v825
      %v836 = vmul.f32 %v449, %v825
      %v837 = vmul.f32 %v819, %v825
      %v838 = vmul.f32 %v451, %v825
      %v839 = vmul.f32 %v820, %v825
      %v840 = vmul.f32 %v453, %v825
      %v841 = vmul.f32 %v821, %v825
      %v842 = vadd.f32 %v798, %v826
      %v843 = vadd.f32 %v799, %v827
      %v844 = vadd.f32 %v800, %v828
      %v845 = vadd.f32 %v801, %v829
      %v846 = vadd.f32 %v802, %v830
      %v847 = vadd.f32 %v803, %v831
      %v848 = vadd.f32 %v804, %v832
      %v849 = vadd.f32 %v805, %v833
      %v850 = vadd.f32 %v806, %v834
      %v851 = vadd.f32 %v807, %v835
      %v852 = vadd.f32 %v808, %v836
      %v853 = vadd.f32 %v809, %v837
      %v854 = vadd.f32 %v810, %v838
      %v855 = vadd.f32 %v811, %v839
      %v856 = vadd.f32 %v812, %v840
      %v857 = vadd.f32 %v813, %v841
      %v858 = vld [vmem:[%s193 + $0x16] sm:$0xff]
      %v859 = vld [vmem:[%s193 + $0x36] sm:$0xff]
      %v860 = vld [vmem:[%s193 + $0x56] sm:$0xff]
      %v861 = vld [vmem:[%s193 + $0x76] sm:$0xff]
      %v862 = vld [vmem:[%s193 + $0x96] sm:$0xff]
      %v863 = vld [vmem:[%s193 + $0xb6] sm:$0xff]
      %v864 = vld [vmem:[%s193 + $0xd6] sm:$0xff]
      %v865 = vld [vmem:[%s193 + $0xf6] sm:$0xff]
      %v866 = vlaneseq
      %v867 = vshrl.u32 %v866, 7
      %v868 = vsub.s32 6, %v867
      %v869 = vrot.slane %v191, %v868
      %v870 = vmul.f32 %v491, %v869
      %v871 = vmul.f32 %v858, %v869
      %v872 = vmul.f32 %v493, %v869
      %v873 = vmul.f32 %v859, %v869
      %v874 = vmul.f32 %v495, %v869
      %v875 = vmul.f32 %v860, %v869
      %v876 = vmul.f32 %v497, %v869
      %v877 = vmul.f32 %v861, %v869
      %v878 = vmul.f32 %v499, %v869
      %v879 = vmul.f32 %v862, %v869
      %v880 = vmul.f32 %v501, %v869
      %v881 = vmul.f32 %v863, %v869
      %v882 = vmul.f32 %v503, %v869
      %v883 = vmul.f32 %v864, %v869
      %v884 = vmul.f32 %v505, %v869
      %v885 = vmul.f32 %v865, %v869
      %v886 = vadd.f32 %v842, %v870
      %v887 = vadd.f32 %v843, %v871
      %v888 = vadd.f32 %v844, %v872
      %v889 = vadd.f32 %v845, %v873
      %v890 = vadd.f32 %v846, %v874
      %v891 = vadd.f32 %v847, %v875
      %v892 = vadd.f32 %v848, %v876
      %v893 = vadd.f32 %v849, %v877
      %v894 = vadd.f32 %v850, %v878
      %v895 = vadd.f32 %v851, %v879
      %v896 = vadd.f32 %v852, %v880
      %v897 = vadd.f32 %v853, %v881
      %v898 = vadd.f32 %v854, %v882
      %v899 = vadd.f32 %v855, %v883
      %v900 = vadd.f32 %v856, %v884
      %v901 = vadd.f32 %v857, %v885
      loop: start=1, step=1, limit=15
      $region29: #{tpu_custom_call.1} parent=27 // loop_pre_header
        _
      $region30: #{tpu_custom_call.1} parent=27 // loop_header
        %s903 = sphi 1, %s907
        %p904 = scmp.ge.s32.totalorder %s903, 15
        %v908 = vphi %v886, %v1639
        %v909 = vphi %v887, %v1640
        %v910 = vphi %v888, %v1641
        %v911 = vphi %v889, %v1642
        %v912 = vphi %v890, %v1643
        %v913 = vphi %v891, %v1644
        %v914 = vphi %v892, %v1645
        %v915 = vphi %v893, %v1646
        %v916 = vphi %v894, %v1647
        %v917 = vphi %v895, %v1648
        %v918 = vphi %v896, %v1649
        %v919 = vphi %v897, %v1650
        %v920 = vphi %v898, %v1651
        %v921 = vphi %v899, %v1652
        %v922 = vphi %v900, %v1653
        %v923 = vphi %v901, %v1654
      $region31: #{tpu_custom_call.1} parent=27 // loop_header_branch
        %906 = sbr.rel (%p904) target = $region35
      $region32: #{tpu_custom_call.1} parent=27 // loop_body
        %s924 = smul.u32 %s903, 16
        %s925 = scalar_lea.vmem %s172, %s924
        %v926 = vld [vmem:[%s925] sm:$0xff]
        %v927 = vld [vmem:[%s925 + $0x8] sm:$0x7f]
        %s928 = sadd.s32 %s189, %s903
        %s929 = smul.u32 %s928, 32
        %s930 = scalar_lea.vmem %s177, %s929
        %v931 = vld [vmem:[%s930] sm:$0xff]
        %v932 = vld [vmem:[%s930 + $0x8] sm:$0xff]
        %v933 = vld [vmem:[%s930 + $0x20] sm:$0xff]
        %v934 = vld [vmem:[%s930 + $0x28] sm:$0xff]
        %v935 = vld [vmem:[%s930 + $0x40] sm:$0xff]
        %v936 = vld [vmem:[%s930 + $0x48] sm:$0xff]
        %v937 = vld [vmem:[%s930 + $0x60] sm:$0xff]
        %v938 = vld [vmem:[%s930 + $0x68] sm:$0xff]
        %v939 = vld [vmem:[%s930 + $0x80] sm:$0xff]
        %v940 = vld [vmem:[%s930 + $0x88] sm:$0xff]
        %v941 = vld [vmem:[%s930 + $0xa0] sm:$0xff]
        %v942 = vld [vmem:[%s930 + $0xa8] sm:$0xff]
        %v943 = vld [vmem:[%s930 + $0xc0] sm:$0xff]
        %v944 = vld [vmem:[%s930 + $0xc8] sm:$0xff]
        %v945 = vld [vmem:[%s930 + $0xe0] sm:$0xff]
        %v946 = vld [vmem:[%s930 + $0xe8] sm:$0xff]
        %v947 = vlaneseq
        %v948 = vshrl.u32 %v947, 7
        %v949 = vsub.s32 0, %v948
        %v950 = vrot.slane %v926, %v949
        %v951 = vmul.f32 %v931, %v950
        %v952 = vmul.f32 %v932, %v950
        %v953 = vmul.f32 %v933, %v950
        %v954 = vmul.f32 %v934, %v950
        %v955 = vmul.f32 %v935, %v950
        %v956 = vmul.f32 %v936, %v950
        %v957 = vmul.f32 %v937, %v950
        %v958 = vmul.f32 %v938, %v950
        %v959 = vmul.f32 %v939, %v950
        %v960 = vmul.f32 %v940, %v950
        %v961 = vmul.f32 %v941, %v950
        %v962 = vmul.f32 %v942, %v950
        %v963 = vmul.f32 %v943, %v950
        %v964 = vmul.f32 %v944, %v950
        %v965 = vmul.f32 %v945, %v950
        %v966 = vmul.f32 %v946, %v950
        %v967 = vadd.f32 %v908, %v951
        %v968 = vadd.f32 %v909, %v952
        %v969 = vadd.f32 %v910, %v953
        %v970 = vadd.f32 %v911, %v954
        %v971 = vadd.f32 %v912, %v955
        %v972 = vadd.f32 %v913, %v956
        %v973 = vadd.f32 %v914, %v957
        %v974 = vadd.f32 %v915, %v958
        %v975 = vadd.f32 %v916, %v959
        %v976 = vadd.f32 %v917, %v960
        %v977 = vadd.f32 %v918, %v961
        %v978 = vadd.f32 %v919, %v962
        %v979 = vadd.f32 %v920, %v963
        %v980 = vadd.f32 %v921, %v964
        %v981 = vadd.f32 %v922, %v965
        %v982 = vadd.f32 %v923, %v966
        %v983 = vld [vmem:[%s930 + $0x1] sm:$0xff]
        %v984 = vld [vmem:[%s930 + $0x9] sm:$0xff]
        %v985 = vld [vmem:[%s930 + $0x21] sm:$0xff]
        %v986 = vld [vmem:[%s930 + $0x29] sm:$0xff]
        %v987 = vld [vmem:[%s930 + $0x41] sm:$0xff]
        %v988 = vld [vmem:[%s930 + $0x49] sm:$0xff]
        %v989 = vld [vmem:[%s930 + $0x61] sm:$0xff]
        %v990 = vld [vmem:[%s930 + $0x69] sm:$0xff]
        %v991 = vld [vmem:[%s930 + $0x81] sm:$0xff]
        %v992 = vld [vmem:[%s930 + $0x89] sm:$0xff]
        %v993 = vld [vmem:[%s930 + $0xa1] sm:$0xff]
        %v994 = vld [vmem:[%s930 + $0xa9] sm:$0xff]
        %v995 = vld [vmem:[%s930 + $0xc1] sm:$0xff]
        %v996 = vld [vmem:[%s930 + $0xc9] sm:$0xff]
        %v997 = vld [vmem:[%s930 + $0xe1] sm:$0xff]
        %v998 = vld [vmem:[%s930 + $0xe9] sm:$0xff]
        %v999 = vlaneseq
        %v1000 = vshrl.u32 %v999, 7
        %v1001 = vsub.s32 1, %v1000
        %v1002 = vrot.slane %v926, %v1001
        %v1003 = vmul.f32 %v983, %v1002
        %v1004 = vmul.f32 %v984, %v1002
        %v1005 = vmul.f32 %v985, %v1002
        %v1006 = vmul.f32 %v986, %v1002
        %v1007 = vmul.f32 %v987, %v1002
        %v1008 = vmul.f32 %v988, %v1002
        %v1009 = vmul.f32 %v989, %v1002
        %v1010 = vmul.f32 %v990, %v1002
        %v1011 = vmul.f32 %v991, %v1002
        %v1012 = vmul.f32 %v992, %v1002
        %v1013 = vmul.f32 %v993, %v1002
        %v1014 = vmul.f32 %v994, %v1002
        %v1015 = vmul.f32 %v995, %v1002
        %v1016 = vmul.f32 %v996, %v1002
        %v1017 = vmul.f32 %v997, %v1002
        %v1018 = vmul.f32 %v998, %v1002
        %v1019 = vadd.f32 %v967, %v1003
        %v1020 = vadd.f32 %v968, %v1004
        %v1021 = vadd.f32 %v969, %v1005
        %v1022 = vadd.f32 %v970, %v1006
        %v1023 = vadd.f32 %v971, %v1007
        %v1024 = vadd.f32 %v972, %v1008
        %v1025 = vadd.f32 %v973, %v1009
        %v1026 = vadd.f32 %v974, %v1010
        %v1027 = vadd.f32 %v975, %v1011
        %v1028 = vadd.f32 %v976, %v1012
        %v1029 = vadd.f32 %v977, %v1013
        %v1030 = vadd.f32 %v978, %v1014
        %v1031 = vadd.f32 %v979, %v1015
        %v1032 = vadd.f32 %v980, %v1016
        %v1033 = vadd.f32 %v981, %v1017
        %v1034 = vadd.f32 %v982, %v1018
        %v1035 = vld [vmem:[%s930 + $0x2] sm:$0xff]
        %v1036 = vld [vmem:[%s930 + $0xa] sm:$0xff]
        %v1037 = vld [vmem:[%s930 + $0x22] sm:$0xff]
        %v1038 = vld [vmem:[%s930 + $0x2a] sm:$0xff]
        %v1039 = vld [vmem:[%s930 + $0x42] sm:$0xff]
        %v1040 = vld [vmem:[%s930 + $0x4a] sm:$0xff]
        %v1041 = vld [vmem:[%s930 + $0x62] sm:$0xff]
        %v1042 = vld [vmem:[%s930 + $0x6a] sm:$0xff]
        %v1043 = vld [vmem:[%s930 + $0x82] sm:$0xff]
        %v1044 = vld [vmem:[%s930 + $0x8a] sm:$0xff]
        %v1045 = vld [vmem:[%s930 + $0xa2] sm:$0xff]
        %v1046 = vld [vmem:[%s930 + $0xaa] sm:$0xff]
        %v1047 = vld [vmem:[%s930 + $0xc2] sm:$0xff]
        %v1048 = vld [vmem:[%s930 + $0xca] sm:$0xff]
        %v1049 = vld [vmem:[%s930 + $0xe2] sm:$0xff]
        %v1050 = vld [vmem:[%s930 + $0xea] sm:$0xff]
        %v1051 = vlaneseq
        %v1052 = vshrl.u32 %v1051, 7
        %v1053 = vsub.s32 2, %v1052
        %v1054 = vrot.slane %v926, %v1053
        %v1055 = vmul.f32 %v1035, %v1054
        %v1056 = vmul.f32 %v1036, %v1054
        %v1057 = vmul.f32 %v1037, %v1054
        %v1058 = vmul.f32 %v1038, %v1054
        %v1059 = vmul.f32 %v1039, %v1054
        %v1060 = vmul.f32 %v1040, %v1054
        %v1061 = vmul.f32 %v1041, %v1054
        %v1062 = vmul.f32 %v1042, %v1054
        %v1063 = vmul.f32 %v1043, %v1054
        %v1064 = vmul.f32 %v1044, %v1054
        %v1065 = vmul.f32 %v1045, %v1054
        %v1066 = vmul.f32 %v1046, %v1054
        %v1067 = vmul.f32 %v1047, %v1054
        %v1068 = vmul.f32 %v1048, %v1054
        %v1069 = vmul.f32 %v1049, %v1054
        %v1070 = vmul.f32 %v1050, %v1054
        %v1071 = vadd.f32 %v1019, %v1055
        %v1072 = vadd.f32 %v1020, %v1056
        %v1073 = vadd.f32 %v1021, %v1057
        %v1074 = vadd.f32 %v1022, %v1058
        %v1075 = vadd.f32 %v1023, %v1059
        %v1076 = vadd.f32 %v1024, %v1060
        %v1077 = vadd.f32 %v1025, %v1061
        %v1078 = vadd.f32 %v1026, %v1062
        %v1079 = vadd.f32 %v1027, %v1063
        %v1080 = vadd.f32 %v1028, %v1064
        %v1081 = vadd.f32 %v1029, %v1065
        %v1082 = vadd.f32 %v1030, %v1066
        %v1083 = vadd.f32 %v1031, %v1067
        %v1084 = vadd.f32 %v1032, %v1068
        %v1085 = vadd.f32 %v1033, %v1069
        %v1086 = vadd.f32 %v1034, %v1070
        %v1087 = vld [vmem:[%s930 + $0x3] sm:$0xff]
        %v1088 = vld [vmem:[%s930 + $0xb] sm:$0xff]
        %v1089 = vld [vmem:[%s930 + $0x23] sm:$0xff]
        %v1090 = vld [vmem:[%s930 + $0x2b] sm:$0xff]
        %v1091 = vld [vmem:[%s930 + $0x43] sm:$0xff]
        %v1092 = vld [vmem:[%s930 + $0x4b] sm:$0xff]
        %v1093 = vld [vmem:[%s930 + $0x63] sm:$0xff]
        %v1094 = vld [vmem:[%s930 + $0x6b] sm:$0xff]
        %v1095 = vld [vmem:[%s930 + $0x83] sm:$0xff]
        %v1096 = vld [vmem:[%s930 + $0x8b] sm:$0xff]
        %v1097 = vld [vmem:[%s930 + $0xa3] sm:$0xff]
        %v1098 = vld [vmem:[%s930 + $0xab] sm:$0xff]
        %v1099 = vld [vmem:[%s930 + $0xc3] sm:$0xff]
        %v1100 = vld [vmem:[%s930 + $0xcb] sm:$0xff]
        %v1101 = vld [vmem:[%s930 + $0xe3] sm:$0xff]
        %v1102 = vld [vmem:[%s930 + $0xeb] sm:$0xff]
        %v1103 = vlaneseq
        %v1104 = vshrl.u32 %v1103, 7
        %v1105 = vsub.s32 3, %v1104
        %v1106 = vrot.slane %v926, %v1105
        %v1107 = vmul.f32 %v1087, %v1106
        %v1108 = vmul.f32 %v1088, %v1106
        %v1109 = vmul.f32 %v1089, %v1106
        %v1110 = vmul.f32 %v1090, %v1106
        %v1111 = vmul.f32 %v1091, %v1106
        %v1112 = vmul.f32 %v1092, %v1106
        %v1113 = vmul.f32 %v1093, %v1106
        %v1114 = vmul.f32 %v1094, %v1106
        %v1115 = vmul.f32 %v1095, %v1106
        %v1116 = vmul.f32 %v1096, %v1106
        %v1117 = vmul.f32 %v1097, %v1106
        %v1118 = vmul.f32 %v1098, %v1106
        %v1119 = vmul.f32 %v1099, %v1106
        %v1120 = vmul.f32 %v1100, %v1106
        %v1121 = vmul.f32 %v1101, %v1106
        %v1122 = vmul.f32 %v1102, %v1106
        %v1123 = vadd.f32 %v1071, %v1107
        %v1124 = vadd.f32 %v1072, %v1108
        %v1125 = vadd.f32 %v1073, %v1109
        %v1126 = vadd.f32 %v1074, %v1110
        %v1127 = vadd.f32 %v1075, %v1111
        %v1128 = vadd.f32 %v1076, %v1112
        %v1129 = vadd.f32 %v1077, %v1113
        %v1130 = vadd.f32 %v1078, %v1114
        %v1131 = vadd.f32 %v1079, %v1115
        %v1132 = vadd.f32 %v1080, %v1116
        %v1133 = vadd.f32 %v1081, %v1117
        %v1134 = vadd.f32 %v1082, %v1118
        %v1135 = vadd.f32 %v1083, %v1119
        %v1136 = vadd.f32 %v1084, %v1120
        %v1137 = vadd.f32 %v1085, %v1121
        %v1138 = vadd.f32 %v1086, %v1122
        %v1139 = vld [vmem:[%s930 + $0x4] sm:$0xff]
        %v1140 = vld [vmem:[%s930 + $0xc] sm:$0xff]
        %v1141 = vld [vmem:[%s930 + $0x24] sm:$0xff]
        %v1142 = vld [vmem:[%s930 + $0x2c] sm:$0xff]
        %v1143 = vld [vmem:[%s930 + $0x44] sm:$0xff]
        %v1144 = vld [vmem:[%s930 + $0x4c] sm:$0xff]
        %v1145 = vld [vmem:[%s930 + $0x64] sm:$0xff]
        %v1146 = vld [vmem:[%s930 + $0x6c] sm:$0xff]
        %v1147 = vld [vmem:[%s930 + $0x84] sm:$0xff]
        %v1148 = vld [vmem:[%s930 + $0x8c] sm:$0xff]
        %v1149 = vld [vmem:[%s930 + $0xa4] sm:$0xff]
        %v1150 = vld [vmem:[%s930 + $0xac] sm:$0xff]
        %v1151 = vld [vmem:[%s930 + $0xc4] sm:$0xff]
        %v1152 = vld [vmem:[%s930 + $0xcc] sm:$0xff]
        %v1153 = vld [vmem:[%s930 + $0xe4] sm:$0xff]
        %v1154 = vld [vmem:[%s930 + $0xec] sm:$0xff]
        %v1155 = vlaneseq
        %v1156 = vshrl.u32 %v1155, 7
        %v1157 = vsub.s32 4, %v1156
        %v1158 = vrot.slane %v926, %v1157
        %v1159 = vmul.f32 %v1139, %v1158
        %v1160 = vmul.f32 %v1140, %v1158
        %v1161 = vmul.f32 %v1141, %v1158
        %v1162 = vmul.f32 %v1142, %v1158
        %v1163 = vmul.f32 %v1143, %v1158
        %v1164 = vmul.f32 %v1144, %v1158
        %v1165 = vmul.f32 %v1145, %v1158
        %v1166 = vmul.f32 %v1146, %v1158
        %v1167 = vmul.f32 %v1147, %v1158
        %v1168 = vmul.f32 %v1148, %v1158
        %v1169 = vmul.f32 %v1149, %v1158
        %v1170 = vmul.f32 %v1150, %v1158
        %v1171 = vmul.f32 %v1151, %v1158
        %v1172 = vmul.f32 %v1152, %v1158
        %v1173 = vmul.f32 %v1153, %v1158
        %v1174 = vmul.f32 %v1154, %v1158
        %v1175 = vadd.f32 %v1123, %v1159
        %v1176 = vadd.f32 %v1124, %v1160
        %v1177 = vadd.f32 %v1125, %v1161
        %v1178 = vadd.f32 %v1126, %v1162
        %v1179 = vadd.f32 %v1127, %v1163
        %v1180 = vadd.f32 %v1128, %v1164
        %v1181 = vadd.f32 %v1129, %v1165
        %v1182 = vadd.f32 %v1130, %v1166
        %v1183 = vadd.f32 %v1131, %v1167
        %v1184 = vadd.f32 %v1132, %v1168
        %v1185 = vadd.f32 %v1133, %v1169
        %v1186 = vadd.f32 %v1134, %v1170
        %v1187 = vadd.f32 %v1135, %v1171
        %v1188 = vadd.f32 %v1136, %v1172
        %v1189 = vadd.f32 %v1137, %v1173
        %v1190 = vadd.f32 %v1138, %v1174
        %v1191 = vld [vmem:[%s930 + $0x5] sm:$0xff]
        %v1192 = vld [vmem:[%s930 + $0xd] sm:$0xff]
        %v1193 = vld [vmem:[%s930 + $0x25] sm:$0xff]
        %v1194 = vld [vmem:[%s930 + $0x2d] sm:$0xff]
        %v1195 = vld [vmem:[%s930 + $0x45] sm:$0xff]
        %v1196 = vld [vmem:[%s930 + $0x4d] sm:$0xff]
        %v1197 = vld [vmem:[%s930 + $0x65] sm:$0xff]
        %v1198 = vld [vmem:[%s930 + $0x6d] sm:$0xff]
        %v1199 = vld [vmem:[%s930 + $0x85] sm:$0xff]
        %v1200 = vld [vmem:[%s930 + $0x8d] sm:$0xff]
        %v1201 = vld [vmem:[%s930 + $0xa5] sm:$0xff]
        %v1202 = vld [vmem:[%s930 + $0xad] sm:$0xff]
        %v1203 = vld [vmem:[%s930 + $0xc5] sm:$0xff]
        %v1204 = vld [vmem:[%s930 + $0xcd] sm:$0xff]
        %v1205 = vld [vmem:[%s930 + $0xe5] sm:$0xff]
        %v1206 = vld [vmem:[%s930 + $0xed] sm:$0xff]
        %v1207 = vlaneseq
        %v1208 = vshrl.u32 %v1207, 7
        %v1209 = vsub.s32 5, %v1208
        %v1210 = vrot.slane %v926, %v1209
        %v1211 = vmul.f32 %v1191, %v1210
        %v1212 = vmul.f32 %v1192, %v1210
        %v1213 = vmul.f32 %v1193, %v1210
        %v1214 = vmul.f32 %v1194, %v1210
        %v1215 = vmul.f32 %v1195, %v1210
        %v1216 = vmul.f32 %v1196, %v1210
        %v1217 = vmul.f32 %v1197, %v1210
        %v1218 = vmul.f32 %v1198, %v1210
        %v1219 = vmul.f32 %v1199, %v1210
        %v1220 = vmul.f32 %v1200, %v1210
        %v1221 = vmul.f32 %v1201, %v1210
        %v1222 = vmul.f32 %v1202, %v1210
        %v1223 = vmul.f32 %v1203, %v1210
        %v1224 = vmul.f32 %v1204, %v1210
        %v1225 = vmul.f32 %v1205, %v1210
        %v1226 = vmul.f32 %v1206, %v1210
        %v1227 = vadd.f32 %v1175, %v1211
        %v1228 = vadd.f32 %v1176, %v1212
        %v1229 = vadd.f32 %v1177, %v1213
        %v1230 = vadd.f32 %v1178, %v1214
        %v1231 = vadd.f32 %v1179, %v1215
        %v1232 = vadd.f32 %v1180, %v1216
        %v1233 = vadd.f32 %v1181, %v1217
        %v1234 = vadd.f32 %v1182, %v1218
        %v1235 = vadd.f32 %v1183, %v1219
        %v1236 = vadd.f32 %v1184, %v1220
        %v1237 = vadd.f32 %v1185, %v1221
        %v1238 = vadd.f32 %v1186, %v1222
        %v1239 = vadd.f32 %v1187, %v1223
        %v1240 = vadd.f32 %v1188, %v1224
        %v1241 = vadd.f32 %v1189, %v1225
        %v1242 = vadd.f32 %v1190, %v1226
        %v1243 = vld [vmem:[%s930 + $0x6] sm:$0xff]
        %v1244 = vld [vmem:[%s930 + $0xe] sm:$0xff]
        %v1245 = vld [vmem:[%s930 + $0x26] sm:$0xff]
        %v1246 = vld [vmem:[%s930 + $0x2e] sm:$0xff]
        %v1247 = vld [vmem:[%s930 + $0x46] sm:$0xff]
        %v1248 = vld [vmem:[%s930 + $0x4e] sm:$0xff]
        %v1249 = vld [vmem:[%s930 + $0x66] sm:$0xff]
        %v1250 = vld [vmem:[%s930 + $0x6e] sm:$0xff]
        %v1251 = vld [vmem:[%s930 + $0x86] sm:$0xff]
        %v1252 = vld [vmem:[%s930 + $0x8e] sm:$0xff]
        %v1253 = vld [vmem:[%s930 + $0xa6] sm:$0xff]
        %v1254 = vld [vmem:[%s930 + $0xae] sm:$0xff]
        %v1255 = vld [vmem:[%s930 + $0xc6] sm:$0xff]
        %v1256 = vld [vmem:[%s930 + $0xce] sm:$0xff]
        %v1257 = vld [vmem:[%s930 + $0xe6] sm:$0xff]
        %v1258 = vld [vmem:[%s930 + $0xee] sm:$0xff]
        %v1259 = vlaneseq
        %v1260 = vshrl.u32 %v1259, 7
        %v1261 = vsub.s32 6, %v1260
        %v1262 = vrot.slane %v926, %v1261
        %v1263 = vmul.f32 %v1243, %v1262
        %v1264 = vmul.f32 %v1244, %v1262
        %v1265 = vmul.f32 %v1245, %v1262
        %v1266 = vmul.f32 %v1246, %v1262
        %v1267 = vmul.f32 %v1247, %v1262
        %v1268 = vmul.f32 %v1248, %v1262
        %v1269 = vmul.f32 %v1249, %v1262
        %v1270 = vmul.f32 %v1250, %v1262
        %v1271 = vmul.f32 %v1251, %v1262
        %v1272 = vmul.f32 %v1252, %v1262
        %v1273 = vmul.f32 %v1253, %v1262
        %v1274 = vmul.f32 %v1254, %v1262
        %v1275 = vmul.f32 %v1255, %v1262
        %v1276 = vmul.f32 %v1256, %v1262
        %v1277 = vmul.f32 %v1257, %v1262
        %v1278 = vmul.f32 %v1258, %v1262
        %v1279 = vadd.f32 %v1227, %v1263
        %v1280 = vadd.f32 %v1228, %v1264
        %v1281 = vadd.f32 %v1229, %v1265
        %v1282 = vadd.f32 %v1230, %v1266
        %v1283 = vadd.f32 %v1231, %v1267
        %v1284 = vadd.f32 %v1232, %v1268
        %v1285 = vadd.f32 %v1233, %v1269
        %v1286 = vadd.f32 %v1234, %v1270
        %v1287 = vadd.f32 %v1235, %v1271
        %v1288 = vadd.f32 %v1236, %v1272
        %v1289 = vadd.f32 %v1237, %v1273
        %v1290 = vadd.f32 %v1238, %v1274
        %v1291 = vadd.f32 %v1239, %v1275
        %v1292 = vadd.f32 %v1240, %v1276
        %v1293 = vadd.f32 %v1241, %v1277
        %v1294 = vadd.f32 %v1242, %v1278
        %v1295 = vld [vmem:[%s930 + $0x7] sm:$0xff]
        %v1296 = vld [vmem:[%s930 + $0xf] sm:$0xff]
        %v1297 = vld [vmem:[%s930 + $0x27] sm:$0xff]
        %v1298 = vld [vmem:[%s930 + $0x2f] sm:$0xff]
        %v1299 = vld [vmem:[%s930 + $0x47] sm:$0xff]
        %v1300 = vld [vmem:[%s930 + $0x4f] sm:$0xff]
        %v1301 = vld [vmem:[%s930 + $0x67] sm:$0xff]
        %v1302 = vld [vmem:[%s930 + $0x6f] sm:$0xff]
        %v1303 = vld [vmem:[%s930 + $0x87] sm:$0xff]
        %v1304 = vld [vmem:[%s930 + $0x8f] sm:$0xff]
        %v1305 = vld [vmem:[%s930 + $0xa7] sm:$0xff]
        %v1306 = vld [vmem:[%s930 + $0xaf] sm:$0xff]
        %v1307 = vld [vmem:[%s930 + $0xc7] sm:$0xff]
        %v1308 = vld [vmem:[%s930 + $0xcf] sm:$0xff]
        %v1309 = vld [vmem:[%s930 + $0xe7] sm:$0xff]
        %v1310 = vld [vmem:[%s930 + $0xef] sm:$0xff]
        %v1311 = vlaneseq
        %v1312 = vshrl.u32 %v1311, 7
        %v1313 = vsub.s32 7, %v1312
        %v1314 = vrot.slane %v926, %v1313
        %v1315 = vmul.f32 %v1295, %v1314
        %v1316 = vmul.f32 %v1296, %v1314
        %v1317 = vmul.f32 %v1297, %v1314
        %v1318 = vmul.f32 %v1298, %v1314
        %v1319 = vmul.f32 %v1299, %v1314
        %v1320 = vmul.f32 %v1300, %v1314
        %v1321 = vmul.f32 %v1301, %v1314
        %v1322 = vmul.f32 %v1302, %v1314
        %v1323 = vmul.f32 %v1303, %v1314
        %v1324 = vmul.f32 %v1304, %v1314
        %v1325 = vmul.f32 %v1305, %v1314
        %v1326 = vmul.f32 %v1306, %v1314
        %v1327 = vmul.f32 %v1307, %v1314
        %v1328 = vmul.f32 %v1308, %v1314
        %v1329 = vmul.f32 %v1309, %v1314
        %v1330 = vmul.f32 %v1310, %v1314
        %v1331 = vadd.f32 %v1279, %v1315
        %v1332 = vadd.f32 %v1280, %v1316
        %v1333 = vadd.f32 %v1281, %v1317
        %v1334 = vadd.f32 %v1282, %v1318
        %v1335 = vadd.f32 %v1283, %v1319
        %v1336 = vadd.f32 %v1284, %v1320
        %v1337 = vadd.f32 %v1285, %v1321
        %v1338 = vadd.f32 %v1286, %v1322
        %v1339 = vadd.f32 %v1287, %v1323
        %v1340 = vadd.f32 %v1288, %v1324
        %v1341 = vadd.f32 %v1289, %v1325
        %v1342 = vadd.f32 %v1290, %v1326
        %v1343 = vadd.f32 %v1291, %v1327
        %v1344 = vadd.f32 %v1292, %v1328
        %v1345 = vadd.f32 %v1293, %v1329
        %v1346 = vadd.f32 %v1294, %v1330
        %v1347 = vld [vmem:[%s930 + $0x10] sm:$0xff]
        %v1348 = vld [vmem:[%s930 + $0x30] sm:$0xff]
        %v1349 = vld [vmem:[%s930 + $0x50] sm:$0xff]
        %v1350 = vld [vmem:[%s930 + $0x70] sm:$0xff]
        %v1351 = vld [vmem:[%s930 + $0x90] sm:$0xff]
        %v1352 = vld [vmem:[%s930 + $0xb0] sm:$0xff]
        %v1353 = vld [vmem:[%s930 + $0xd0] sm:$0xff]
        %v1354 = vld [vmem:[%s930 + $0xf0] sm:$0xff]
        %v1355 = vlaneseq
        %v1356 = vshrl.u32 %v1355, 7
        %v1357 = vsub.s32 0, %v1356
        %v1358 = vrot.slane %v927, %v1357
        %v1359 = vmul.f32 %v932, %v1358
        %v1360 = vmul.f32 %v1347, %v1358
        %v1361 = vmul.f32 %v934, %v1358
        %v1362 = vmul.f32 %v1348, %v1358
        %v1363 = vmul.f32 %v936, %v1358
        %v1364 = vmul.f32 %v1349, %v1358
        %v1365 = vmul.f32 %v938, %v1358
        %v1366 = vmul.f32 %v1350, %v1358
        %v1367 = vmul.f32 %v940, %v1358
        %v1368 = vmul.f32 %v1351, %v1358
        %v1369 = vmul.f32 %v942, %v1358
        %v1370 = vmul.f32 %v1352, %v1358
        %v1371 = vmul.f32 %v944, %v1358
        %v1372 = vmul.f32 %v1353, %v1358
        %v1373 = vmul.f32 %v946, %v1358
        %v1374 = vmul.f32 %v1354, %v1358
        %v1375 = vadd.f32 %v1331, %v1359
        %v1376 = vadd.f32 %v1332, %v1360
        %v1377 = vadd.f32 %v1333, %v1361
        %v1378 = vadd.f32 %v1334, %v1362
        %v1379 = vadd.f32 %v1335, %v1363
        %v1380 = vadd.f32 %v1336, %v1364
        %v1381 = vadd.f32 %v1337, %v1365
        %v1382 = vadd.f32 %v1338, %v1366
        %v1383 = vadd.f32 %v1339, %v1367
        %v1384 = vadd.f32 %v1340, %v1368
        %v1385 = vadd.f32 %v1341, %v1369
        %v1386 = vadd.f32 %v1342, %v1370
        %v1387 = vadd.f32 %v1343, %v1371
        %v1388 = vadd.f32 %v1344, %v1372
        %v1389 = vadd.f32 %v1345, %v1373
        %v1390 = vadd.f32 %v1346, %v1374
        %v1391 = vld [vmem:[%s930 + $0x11] sm:$0xff]
        %v1392 = vld [vmem:[%s930 + $0x31] sm:$0xff]
        %v1393 = vld [vmem:[%s930 + $0x51] sm:$0xff]
        %v1394 = vld [vmem:[%s930 + $0x71] sm:$0xff]
        %v1395 = vld [vmem:[%s930 + $0x91] sm:$0xff]
        %v1396 = vld [vmem:[%s930 + $0xb1] sm:$0xff]
        %v1397 = vld [vmem:[%s930 + $0xd1] sm:$0xff]
        %v1398 = vld [vmem:[%s930 + $0xf1] sm:$0xff]
        %v1399 = vlaneseq
        %v1400 = vshrl.u32 %v1399, 7
        %v1401 = vsub.s32 1, %v1400
        %v1402 = vrot.slane %v927, %v1401
        %v1403 = vmul.f32 %v984, %v1402
        %v1404 = vmul.f32 %v1391, %v1402
        %v1405 = vmul.f32 %v986, %v1402
        %v1406 = vmul.f32 %v1392, %v1402
        %v1407 = vmul.f32 %v988, %v1402
        %v1408 = vmul.f32 %v1393, %v1402
        %v1409 = vmul.f32 %v990, %v1402
        %v1410 = vmul.f32 %v1394, %v1402
        %v1411 = vmul.f32 %v992, %v1402
        %v1412 = vmul.f32 %v1395, %v1402
        %v1413 = vmul.f32 %v994, %v1402
        %v1414 = vmul.f32 %v1396, %v1402
        %v1415 = vmul.f32 %v996, %v1402
        %v1416 = vmul.f32 %v1397, %v1402
        %v1417 = vmul.f32 %v998, %v1402
        %v1418 = vmul.f32 %v1398, %v1402
        %v1419 = vadd.f32 %v1375, %v1403
        %v1420 = vadd.f32 %v1376, %v1404
        %v1421 = vadd.f32 %v1377, %v1405
        %v1422 = vadd.f32 %v1378, %v1406
        %v1423 = vadd.f32 %v1379, %v1407
        %v1424 = vadd.f32 %v1380, %v1408
        %v1425 = vadd.f32 %v1381, %v1409
        %v1426 = vadd.f32 %v1382, %v1410
        %v1427 = vadd.f32 %v1383, %v1411
        %v1428 = vadd.f32 %v1384, %v1412
        %v1429 = vadd.f32 %v1385, %v1413
        %v1430 = vadd.f32 %v1386, %v1414
        %v1431 = vadd.f32 %v1387, %v1415
        %v1432 = vadd.f32 %v1388, %v1416
        %v1433 = vadd.f32 %v1389, %v1417
        %v1434 = vadd.f32 %v1390, %v1418
        %v1435 = vld [vmem:[%s930 + $0x12] sm:$0xff]
        %v1436 = vld [vmem:[%s930 + $0x32] sm:$0xff]
        %v1437 = vld [vmem:[%s930 + $0x52] sm:$0xff]
        %v1438 = vld [vmem:[%s930 + $0x72] sm:$0xff]
        %v1439 = vld [vmem:[%s930 + $0x92] sm:$0xff]
        %v1440 = vld [vmem:[%s930 + $0xb2] sm:$0xff]
        %v1441 = vld [vmem:[%s930 + $0xd2] sm:$0xff]
        %v1442 = vld [vmem:[%s930 + $0xf2] sm:$0xff]
        %v1443 = vlaneseq
        %v1444 = vshrl.u32 %v1443, 7
        %v1445 = vsub.s32 2, %v1444
        %v1446 = vrot.slane %v927, %v1445
        %v1447 = vmul.f32 %v1036, %v1446
        %v1448 = vmul.f32 %v1435, %v1446
        %v1449 = vmul.f32 %v1038, %v1446
        %v1450 = vmul.f32 %v1436, %v1446
        %v1451 = vmul.f32 %v1040, %v1446
        %v1452 = vmul.f32 %v1437, %v1446
        %v1453 = vmul.f32 %v1042, %v1446
        %v1454 = vmul.f32 %v1438, %v1446
        %v1455 = vmul.f32 %v1044, %v1446
        %v1456 = vmul.f32 %v1439, %v1446
        %v1457 = vmul.f32 %v1046, %v1446
        %v1458 = vmul.f32 %v1440, %v1446
        %v1459 = vmul.f32 %v1048, %v1446
        %v1460 = vmul.f32 %v1441, %v1446
        %v1461 = vmul.f32 %v1050, %v1446
        %v1462 = vmul.f32 %v1442, %v1446
        %v1463 = vadd.f32 %v1419, %v1447
        %v1464 = vadd.f32 %v1420, %v1448
        %v1465 = vadd.f32 %v1421, %v1449
        %v1466 = vadd.f32 %v1422, %v1450
        %v1467 = vadd.f32 %v1423, %v1451
        %v1468 = vadd.f32 %v1424, %v1452
        %v1469 = vadd.f32 %v1425, %v1453
        %v1470 = vadd.f32 %v1426, %v1454
        %v1471 = vadd.f32 %v1427, %v1455
        %v1472 = vadd.f32 %v1428, %v1456
        %v1473 = vadd.f32 %v1429, %v1457
        %v1474 = vadd.f32 %v1430, %v1458
        %v1475 = vadd.f32 %v1431, %v1459
        %v1476 = vadd.f32 %v1432, %v1460
        %v1477 = vadd.f32 %v1433, %v1461
        %v1478 = vadd.f32 %v1434, %v1462
        %v1479 = vld [vmem:[%s930 + $0x13] sm:$0xff]
        %v1480 = vld [vmem:[%s930 + $0x33] sm:$0xff]
        %v1481 = vld [vmem:[%s930 + $0x53] sm:$0xff]
        %v1482 = vld [vmem:[%s930 + $0x73] sm:$0xff]
        %v1483 = vld [vmem:[%s930 + $0x93] sm:$0xff]
        %v1484 = vld [vmem:[%s930 + $0xb3] sm:$0xff]
        %v1485 = vld [vmem:[%s930 + $0xd3] sm:$0xff]
        %v1486 = vld [vmem:[%s930 + $0xf3] sm:$0xff]
        %v1487 = vlaneseq
        %v1488 = vshrl.u32 %v1487, 7
        %v1489 = vsub.s32 3, %v1488
        %v1490 = vrot.slane %v927, %v1489
        %v1491 = vmul.f32 %v1088, %v1490
        %v1492 = vmul.f32 %v1479, %v1490
        %v1493 = vmul.f32 %v1090, %v1490
        %v1494 = vmul.f32 %v1480, %v1490
        %v1495 = vmul.f32 %v1092, %v1490
        %v1496 = vmul.f32 %v1481, %v1490
        %v1497 = vmul.f32 %v1094, %v1490
        %v1498 = vmul.f32 %v1482, %v1490
        %v1499 = vmul.f32 %v1096, %v1490
        %v1500 = vmul.f32 %v1483, %v1490
        %v1501 = vmul.f32 %v1098, %v1490
        %v1502 = vmul.f32 %v1484, %v1490
        %v1503 = vmul.f32 %v1100, %v1490
        %v1504 = vmul.f32 %v1485, %v1490
        %v1505 = vmul.f32 %v1102, %v1490
        %v1506 = vmul.f32 %v1486, %v1490
        %v1507 = vadd.f32 %v1463, %v1491
        %v1508 = vadd.f32 %v1464, %v1492
        %v1509 = vadd.f32 %v1465, %v1493
        %v1510 = vadd.f32 %v1466, %v1494
        %v1511 = vadd.f32 %v1467, %v1495
        %v1512 = vadd.f32 %v1468, %v1496
        %v1513 = vadd.f32 %v1469, %v1497
        %v1514 = vadd.f32 %v1470, %v1498
        %v1515 = vadd.f32 %v1471, %v1499
        %v1516 = vadd.f32 %v1472, %v1500
        %v1517 = vadd.f32 %v1473, %v1501
        %v1518 = vadd.f32 %v1474, %v1502
        %v1519 = vadd.f32 %v1475, %v1503
        %v1520 = vadd.f32 %v1476, %v1504
        %v1521 = vadd.f32 %v1477, %v1505
        %v1522 = vadd.f32 %v1478, %v1506
        %v1523 = vld [vmem:[%s930 + $0x14] sm:$0xff]
        %v1524 = vld [vmem:[%s930 + $0x34] sm:$0xff]
        %v1525 = vld [vmem:[%s930 + $0x54] sm:$0xff]
        %v1526 = vld [vmem:[%s930 + $0x74] sm:$0xff]
        %v1527 = vld [vmem:[%s930 + $0x94] sm:$0xff]
        %v1528 = vld [vmem:[%s930 + $0xb4] sm:$0xff]
        %v1529 = vld [vmem:[%s930 + $0xd4] sm:$0xff]
        %v1530 = vld [vmem:[%s930 + $0xf4] sm:$0xff]
        %v1531 = vlaneseq
        %v1532 = vshrl.u32 %v1531, 7
        %v1533 = vsub.s32 4, %v1532
        %v1534 = vrot.slane %v927, %v1533
        %v1535 = vmul.f32 %v1140, %v1534
        %v1536 = vmul.f32 %v1523, %v1534
        %v1537 = vmul.f32 %v1142, %v1534
        %v1538 = vmul.f32 %v1524, %v1534
        %v1539 = vmul.f32 %v1144, %v1534
        %v1540 = vmul.f32 %v1525, %v1534
        %v1541 = vmul.f32 %v1146, %v1534
        %v1542 = vmul.f32 %v1526, %v1534
        %v1543 = vmul.f32 %v1148, %v1534
        %v1544 = vmul.f32 %v1527, %v1534
        %v1545 = vmul.f32 %v1150, %v1534
        %v1546 = vmul.f32 %v1528, %v1534
        %v1547 = vmul.f32 %v1152, %v1534
        %v1548 = vmul.f32 %v1529, %v1534
        %v1549 = vmul.f32 %v1154, %v1534
        %v1550 = vmul.f32 %v1530, %v1534
        %v1551 = vadd.f32 %v1507, %v1535
        %v1552 = vadd.f32 %v1508, %v1536
        %v1553 = vadd.f32 %v1509, %v1537
        %v1554 = vadd.f32 %v1510, %v1538
        %v1555 = vadd.f32 %v1511, %v1539
        %v1556 = vadd.f32 %v1512, %v1540
        %v1557 = vadd.f32 %v1513, %v1541
        %v1558 = vadd.f32 %v1514, %v1542
        %v1559 = vadd.f32 %v1515, %v1543
        %v1560 = vadd.f32 %v1516, %v1544
        %v1561 = vadd.f32 %v1517, %v1545
        %v1562 = vadd.f32 %v1518, %v1546
        %v1563 = vadd.f32 %v1519, %v1547
        %v1564 = vadd.f32 %v1520, %v1548
        %v1565 = vadd.f32 %v1521, %v1549
        %v1566 = vadd.f32 %v1522, %v1550
        %v1567 = vld [vmem:[%s930 + $0x15] sm:$0xff]
        %v1568 = vld [vmem:[%s930 + $0x35] sm:$0xff]
        %v1569 = vld [vmem:[%s930 + $0x55] sm:$0xff]
        %v1570 = vld [vmem:[%s930 + $0x75] sm:$0xff]
        %v1571 = vld [vmem:[%s930 + $0x95] sm:$0xff]
        %v1572 = vld [vmem:[%s930 + $0xb5] sm:$0xff]
        %v1573 = vld [vmem:[%s930 + $0xd5] sm:$0xff]
        %v1574 = vld [vmem:[%s930 + $0xf5] sm:$0xff]
        %v1575 = vlaneseq
        %v1576 = vshrl.u32 %v1575, 7
        %v1577 = vsub.s32 5, %v1576
        %v1578 = vrot.slane %v927, %v1577
        %v1579 = vmul.f32 %v1192, %v1578
        %v1580 = vmul.f32 %v1567, %v1578
        %v1581 = vmul.f32 %v1194, %v1578
        %v1582 = vmul.f32 %v1568, %v1578
        %v1583 = vmul.f32 %v1196, %v1578
        %v1584 = vmul.f32 %v1569, %v1578
        %v1585 = vmul.f32 %v1198, %v1578
        %v1586 = vmul.f32 %v1570, %v1578
        %v1587 = vmul.f32 %v1200, %v1578
        %v1588 = vmul.f32 %v1571, %v1578
        %v1589 = vmul.f32 %v1202, %v1578
        %v1590 = vmul.f32 %v1572, %v1578
        %v1591 = vmul.f32 %v1204, %v1578
        %v1592 = vmul.f32 %v1573, %v1578
        %v1593 = vmul.f32 %v1206, %v1578
        %v1594 = vmul.f32 %v1574, %v1578
        %v1595 = vadd.f32 %v1551, %v1579
        %v1596 = vadd.f32 %v1552, %v1580
        %v1597 = vadd.f32 %v1553, %v1581
        %v1598 = vadd.f32 %v1554, %v1582
        %v1599 = vadd.f32 %v1555, %v1583
        %v1600 = vadd.f32 %v1556, %v1584
        %v1601 = vadd.f32 %v1557, %v1585
        %v1602 = vadd.f32 %v1558, %v1586
        %v1603 = vadd.f32 %v1559, %v1587
        %v1604 = vadd.f32 %v1560, %v1588
        %v1605 = vadd.f32 %v1561, %v1589
        %v1606 = vadd.f32 %v1562, %v1590
        %v1607 = vadd.f32 %v1563, %v1591
        %v1608 = vadd.f32 %v1564, %v1592
        %v1609 = vadd.f32 %v1565, %v1593
        %v1610 = vadd.f32 %v1566, %v1594
        %v1611 = vld [vmem:[%s930 + $0x16] sm:$0xff]
        %v1612 = vld [vmem:[%s930 + $0x36] sm:$0xff]
        %v1613 = vld [vmem:[%s930 + $0x56] sm:$0xff]
        %v1614 = vld [vmem:[%s930 + $0x76] sm:$0xff]
        %v1615 = vld [vmem:[%s930 + $0x96] sm:$0xff]
        %v1616 = vld [vmem:[%s930 + $0xb6] sm:$0xff]
        %v1617 = vld [vmem:[%s930 + $0xd6] sm:$0xff]
        %v1618 = vld [vmem:[%s930 + $0xf6] sm:$0xff]
        %v1619 = vlaneseq
        %v1620 = vshrl.u32 %v1619, 7
        %v1621 = vsub.s32 6, %v1620
        %v1622 = vrot.slane %v927, %v1621
        %v1623 = vmul.f32 %v1244, %v1622
        %v1624 = vmul.f32 %v1611, %v1622
        %v1625 = vmul.f32 %v1246, %v1622
        %v1626 = vmul.f32 %v1612, %v1622
        %v1627 = vmul.f32 %v1248, %v1622
        %v1628 = vmul.f32 %v1613, %v1622
        %v1629 = vmul.f32 %v1250, %v1622
        %v1630 = vmul.f32 %v1614, %v1622
        %v1631 = vmul.f32 %v1252, %v1622
        %v1632 = vmul.f32 %v1615, %v1622
        %v1633 = vmul.f32 %v1254, %v1622
        %v1634 = vmul.f32 %v1616, %v1622
        %v1635 = vmul.f32 %v1256, %v1622
        %v1636 = vmul.f32 %v1617, %v1622
        %v1637 = vmul.f32 %v1258, %v1622
        %v1638 = vmul.f32 %v1618, %v1622
        %v1639 = vadd.f32 %v1595, %v1623
        %v1640 = vadd.f32 %v1596, %v1624
        %v1641 = vadd.f32 %v1597, %v1625
        %v1642 = vadd.f32 %v1598, %v1626
        %v1643 = vadd.f32 %v1599, %v1627
        %v1644 = vadd.f32 %v1600, %v1628
        %v1645 = vadd.f32 %v1601, %v1629
        %v1646 = vadd.f32 %v1602, %v1630
        %v1647 = vadd.f32 %v1603, %v1631
        %v1648 = vadd.f32 %v1604, %v1632
        %v1649 = vadd.f32 %v1605, %v1633
        %v1650 = vadd.f32 %v1606, %v1634
        %v1651 = vadd.f32 %v1607, %v1635
        %v1652 = vadd.f32 %v1608, %v1636
        %v1653 = vadd.f32 %v1609, %v1637
        %v1654 = vadd.f32 %v1610, %v1638
      $region33: #{tpu_custom_call.1} parent=27 // loop_footer
        %s907 = sadd.s32 1, %s903
      $region34: #{tpu_custom_call.1} parent=27 // loop_footer_branch
        %902 = sbr.rel target = $region30
      $region35: #{tpu_custom_call.1} parent=27 // loop_exit
        _
      %vm1655 = vcmask 64512
      %1656 = vst.msk [vmem:[%s187] sm:$0xff] %vm1655, %v908
      %1657 = vst.msk [vmem:[%s187 + $0x8] sm:$0xff] %vm1655, %v909
      %1658 = vst.msk [vmem:[%s187 + $0x10] sm:$0xff] %vm1655, %v910
      %1659 = vst.msk [vmem:[%s187 + $0x18] sm:$0xff] %vm1655, %v911
      %1660 = vst.msk [vmem:[%s187 + $0x20] sm:$0xff] %vm1655, %v912
      %1661 = vst.msk [vmem:[%s187 + $0x28] sm:$0xff] %vm1655, %v913
      %1662 = vst.msk [vmem:[%s187 + $0x30] sm:$0xff] %vm1655, %v914
      %1663 = vst.msk [vmem:[%s187 + $0x38] sm:$0xff] %vm1655, %v915
      %1664 = vst.msk [vmem:[%s187 + $0x40] sm:$0xff] %vm1655, %v916
      %1665 = vst.msk [vmem:[%s187 + $0x48] sm:$0xff] %vm1655, %v917
      %1666 = vst.msk [vmem:[%s187 + $0x50] sm:$0xff] %vm1655, %v918
      %1667 = vst.msk [vmem:[%s187 + $0x58] sm:$0xff] %vm1655, %v919
      %1668 = vst.msk [vmem:[%s187 + $0x60] sm:$0xff] %vm1655, %v920
      %1669 = vst.msk [vmem:[%s187 + $0x68] sm:$0xff] %vm1655, %v921
      %1670 = vst.msk [vmem:[%s187 + $0x70] sm:$0xff] %vm1655, %v922
      %1671 = vst.msk [vmem:[%s187 + $0x78] sm:$0xff] %vm1655, %v923
      %s1672 = smul.u32 8, %s18
      %p1673 = scmp.lt.s32.totalorder %s17, 0
      %s1674 = scalar_select %p1673, %s17, 0
      %p1675 = scmp.lt.s32.totalorder %s1672, 15
      %s1676 = scalar_select %p1675, %s1672, 15
      %s1677 = smul.addr %s1676, 2
      %s1678 = smul.addr %s1674, 32
      %s1679 = sadd.s32 %s1677, %s1678
      %s1680 = smul.addr %s1679, 8
      %s1681 = scalar_lea.vmem %s2, %s1680
      // Predicated region
      $region36: #{tpu_custom_call.1} parent=27 // pred_check
        %p1682 = pneg %p97
      $region37: #{tpu_custom_call.1} parent=27 // pred_check_branch
        %1684 = sbr.rel (%p1682) target = $region39
      $region38: #{tpu_custom_call.1} parent=27 // pred_region
        %s1685 = smul.u32 8, %s18
      $region39: #{tpu_custom_call.1} parent=27 // pred_fallthru
        _
    $region28: #{tpu_custom_call.1} parent=5 // pred_fallthru
      _
    %p1686 = scmp.le.s32.totalorder 2, %s8
    // Predicated region
    $region40: #{tpu_custom_call.1} parent=5 // pred_check
      %p1687 = pneg %p1686
    $region41: #{tpu_custom_call.1} parent=5 // pred_check_branch
      %1689 = sbr.rel (%p1687) target = $region43
    $region42: #{tpu_custom_call.1} parent=5 // pred_region
      %s1690 = ssub.s32 %s8, 2
      // Predicated region
      $region44: #{tpu_custom_call.1} parent=42 // pred_check
        %p1691 = pneg %p103
      $region45: #{tpu_custom_call.1} parent=42 // pred_check_branch
        %1693 = sbr.rel (%p1691) target = $region47
      $region46: #{tpu_custom_call.1} parent=42 // pred_region
        %s1694 = smul.u32 8, %s20
        %p1695 = scmp.lt.s32.totalorder %s19, 0
        %s1696 = scalar_select %p1695, %s19, 0
        %p1697 = scmp.lt.s32.totalorder %s1694, 15
        %s1698 = scalar_select %p1697, %s1694, 15
        %s1699 = smul.addr %s1698, 2
        %s1700 = smul.addr %s1696, 32
        %s1701 = sadd.s32 %s1699, %s1700
        %s1702 = smul.addr %s1701, 8
        %s1703 = scalar_lea.vmem %s2, %s1702
      $region47: #{tpu_custom_call.1} parent=42 // pred_fallthru
        _
    $region43: #{tpu_custom_call.1} parent=5 // pred_fallthru
      _
  $region6: #{tpu_custom_call.1} parent=0 // loop_footer
    %s12 = sadd.s32 1, %s8
  $region7: #{tpu_custom_call.1} parent=0 // loop_footer_branch
    %7 = sbr.rel target = $region3
  $region8: #{tpu_custom_call.1} parent=0 // loop_exit
    _

</llo_original>
